<compile_context>
chip_gen: v6e
topology: v6e:2x2x1
jax: 0.10.0
libtpu: 0.0.40
codegen_flags: <defaults>
</compile_context>

<pallas_src>
import numpy as np
import jax
import jax.numpy as jnp
from jax import lax
from jax.experimental import pallas as pl
from jax.experimental.pallas import tpu as pltpu


# ----------------------------------------------------------------------------
# Fused Pallas kernel
# ----------------------------------------------------------------------------
def _make_bottleneck_kernel(H, W, bt, neck, cout, cout_p, has_downsample):
    HW = H * W
    N = bt * HW  # lanes per grid step (bt images side by side)

    def kernel(alpha_ref, x_ref, w1_ref, w2_ref, w3_ref, o_ref):
        a1 = alpha_ref[0]
        a2 = alpha_ref[1]
        a3 = alpha_ref[2]

        x = x_ref[...]                                     # (Cin, N) lane-dense

        # --- conv1 (1x1) fused with the 1x1 downsample: single MXU dot ------
        # (default MXU precision; the f32 reference uses HIGHEST — tolerances
        #  in the test are chosen accordingly)
        td = jnp.dot(w1_ref[...], x, preferred_element_type=jnp.float32)
        if has_downsample:
            ident = td[:cout, :]                # rows [0, cout) -> identity path
            t1 = td[cout_p:cout_p + neck, :]    # offset cout_p is sublane-aligned
        else:
            t1 = td
            ident = x.astype(jnp.float32)
        t1 = jnp.where(t1 >= 0, t1, a1 * t1)               # PReLU 1

        # --- boundary masks (hoisted; shared by all 9 taps) ------------------
        lane = lax.broadcasted_iota(jnp.int32, (1, N), 1)
        col = lane % W                    # column within a row
        pix = lane % HW                   # pixel index within an image
        mask_l = (col >= 1).astype(jnp.float32)
        mask_r = (col <= W - 2).astype(jnp.float32)
        mask_u = (pix >= W).astype(jnp.float32)            # not first row of image
        mask_d = (pix < HW - W).astype(jnp.float32)        # not last row of image

        def tap_mask(dh, dw):
            m = None
            if dh == -1:
                m = mask_u
            elif dh == 1:
                m = mask_d
            if dw == -1:
                m = mask_l if m is None else m * mask_l
            elif dw == 1:
                m = mask_r if m is None else m * mask_r
            return m

        # --- conv2 (3x3, pad=1): rolled taps (XLU) + 9 accumulated MXU dots --
        # Per-image boundary masks also kill any roll wrap across images.
        t2 = None
        for kh in range(3):
            for kw in range(3):
                dh, dw = kh - 1, kw - 1
                delta = dh * W + dw        # s[:, p] should read t1[:, p + delta]
                s = t1 if delta == 0 else pltpu.roll(t1, (-delta) % N, axis=1)
                m = tap_mask(dh, dw)
                if m is not None:
                    s = s * m
                c = jnp.dot(w2_ref[kh * 3 + kw], s,
                            preferred_element_type=jnp.float32)
                t2 = c if t2 is None else t2 + c
        t2 = jnp.where(t2 >= 0, t2, a2 * t2)               # PReLU 2

        # --- conv3 (1x1) + residual + PReLU 3 --------------------------------
        t3 = jnp.dot(w3_ref[...], t2, preferred_element_type=jnp.float32)
        y = t3 + ident
        o_ref[...] = jnp.where(y >= 0, y, a3 * y).astype(o_ref.dtype)

    return kernel


def _choose_batch_tile(B, Cin, neck, Cout, HW, itemsize, budget_bytes=16 << 20):
    """Largest batch tile (divisor of B, lane-aligned) fitting a VMEM budget."""
    for bt in range(B, 0, -1):
        if B % bt:
            continue
        if bt != B and (bt * HW) % 128 != 0:
            continue                    # partial blocks need a 128-aligned lane dim
        n = bt * HW
        io = 2 * n * (Cin + Cout) * itemsize                # double-buffered in/out
        act = 4 * n * (Cin + 3 * neck + 2 * Cout + 4)       # rough f32 live values
        if io + act <= budget_bytes:
            return bt
    return B  # whole batch in one block is always expressible


# ----------------------------------------------------------------------------
# Wrapper (NCHW in / NCHW out, matching the PyTorch module)
# ----------------------------------------------------------------------------
def bottleneck_forward(x_nchw, params, stride=1):
    if stride != 1:
        raise NotImplementedError("TODO(synk): stride > 1 not implemented")
    B, Cin, H, W = x_nchw.shape
    HW = H * W
    neck = params["w1"].shape[0]
    Cout = params["w3"].shape[0]
    has_ds = "wd" in params
    if not has_ds:
        assert Cin == Cout, "identity residual requires in_nc == out_nc"

    itemsize = jnp.dtype(x_nchw.dtype).itemsize
    bt = _choose_batch_tile(B, Cin, neck, Cout, HW, itemsize)
    nblocks = B // bt
    N = bt * HW

    # Fold batch onto lanes: (B, Cin, H, W) -> (Cin, B*HW).  Tiny XLA transpose
    # at these sizes; spatial (+batch) ends up lane-dense inside the kernel.
    x2 = jnp.transpose(x_nchw.reshape(B, Cin, HW), (1, 0, 2)).reshape(Cin, B * HW)

    # Weight prep (host side, tiny).
    w1m = params["w1"].reshape(neck, Cin)
    # per-tap weights: w2_9[kh*3+kw] = w2[:, :, kh, kw]  (out, in)
    w2_9 = jnp.transpose(params["w2"], (2, 3, 0, 1)).reshape(9, neck, neck)
    w3m = params["w3"].reshape(Cout, neck)
    if has_ds:
        cout_p = ((Cout + 7) // 8) * 8          # keep the t1 slice sublane-aligned
        wd_p = jnp.zeros((cout_p, Cin), w1m.dtype).at[:Cout, :].set(
            params["wd"].reshape(Cout, Cin))
        w1d = jnp.concatenate([wd_p, w1m], axis=0)   # (cout_p + neck, Cin)
    else:
        cout_p = 0
        w1d = w1m

    flops = 2 * B * HW * (neck * Cin + 9 * neck * neck + Cout * neck
                          + (Cout * Cin if has_ds else 0))
    bytes_accessed = itemsize * (x2.size + Cout * B * HW) + 4 * (
        int(w1d.size) + int(w2_9.size) + int(w3m.size) + 3)
    cost = pl.CostEstimate(flops=flops, transcendentals=0,
                           bytes_accessed=bytes_accessed)

    out2 = pl.pallas_call(
        _make_bottleneck_kernel(H, W, bt, neck, Cout, cout_p, has_ds),
        out_shape=jax.ShapeDtypeStruct((Cout, B * HW), x_nchw.dtype),
        grid=(nblocks,),
        in_specs=[
            pl.BlockSpec(memory_space=pltpu.MemorySpace.SMEM),       # PReLU alphas
            pl.BlockSpec((Cin, N), lambda i: (0, i)),                # x block
            pl.BlockSpec(tuple(w1d.shape), lambda i: (0, 0)),        # conv1(+ds) weight
            pl.BlockSpec((9, neck, neck), lambda i: (0, 0, 0)),      # conv2 taps
            pl.BlockSpec((Cout, neck), lambda i: (0, 0)),            # conv3 weight
        ],
        out_specs=pl.BlockSpec((Cout, N), lambda i: (0, i)),
        compiler_params=pltpu.CompilerParams(
            dimension_semantics=("parallel",)),
        cost_estimate=cost,
    )(params["alphas"], x2, w1d, w2_9, w3m)

    # (Cout, B*HW) -> (B, Cout, H, W)
    return jnp.transpose(out2.reshape(Cout, B, HW), (1, 0, 2)).reshape(B, Cout, H, W)


# ----------------------------------------------------------------------------
# Parameter construction (bias=False, PReLU with a single alpha each)
# ----------------------------------------------------------------------------
def init_bottleneck_params(key, in_nc, neck_nc, out_nc, dtype=jnp.float32):
    ks = jax.random.split(key, 4)
    s = 0.1
    p = {
        "w1": s * jax.random.normal(ks[0], (neck_nc, in_nc, 1, 1), dtype),
        "w2": s * jax.random.normal(ks[1], (neck_nc, neck_nc, 3, 3), dtype),
        "w3": s * jax.random.normal(ks[2], (out_nc, neck_nc, 1, 1), dtype),
        "alphas": jnp.array([0.25, 0.2, 0.3], dtype),   # PReLU a1, a2, a3
    }
    if in_nc != out_nc:
        p["wd"] = s * jax.random.normal(ks[3], (out_nc, in_nc, 1, 1), dtype)
    return p


# ----------------------------------------------------------------------------
# Pure-JAX reference (correctness check)
# ----------------------------------------------------------------------------
def _conv_ref(x, w, pad):
    return lax.conv_general_dilated(
        x, w, window_strides=(1, 1), padding=[(pad, pad), (pad, pad)],
        dimension_numbers=("NCHW", "OIHW", "NCHW"),
        precision=lax.Precision.HIGHEST)


def bottleneck_reference(x, params):
    a1 = params["alphas"][0]
    a2 = params["alphas"][1]
    a3 = params["alphas"][2]
    prelu = lambda v, a: jnp.where(v >= 0, v, a * v)
    t = prelu(_conv_ref(x, params["w1"], 0), a1)
    t = prelu(_conv_ref(t, params["w2"], 1), a2)
    t = _conv_ref(t, params["w3"], 0)
    ident = _conv_ref(x, params["wd"], 0) if "wd" in params else x
    return prelu(t + ident, a3)


# ----------------------------------------------------------------------------
if __name__ == "__main__":
    key = jax.random.PRNGKey(0)
    B, H, W = 2, 16, 16
    # (in_nc, neck_nc, out_nc): with downsample (in != out) and identity path.
    configs = [(4, 4, 8), (4, 4, 4)]
    for cfg_i, (in_nc, neck_nc, out_nc) in enumerate(configs):
        kx, kp = jax.random.split(jax.random.fold_in(key, cfg_i))
        x = jax.random.normal(kx, (B, in_nc, H, W), dtype=jnp.float32)
        params = init_bottleneck_params(kp, in_nc, neck_nc, out_nc)

        out = jax.block_until_ready(bottleneck_forward(x, params))
        assert out.shape == (B, out_nc, H, W), out.shape

        ref = jax.block_until_ready(bottleneck_reference(x, params))
        np.testing.assert_allclose(np.asarray(out), np.asarray(ref),
                                   rtol=1e-3, atol=1e-4)
    print("KERNEL_OK")
</pallas_src>

<mosaic_0001>
module attributes {stable_mosaic.version = 11 : i64} {
  func.func @kernel(%arg0: i32, %arg1: memref<3xf32, #tpu.memory_space<smem>>, %arg2: memref<4x512xf32, #tpu.memory_space<vmem>>, %arg3: memref<12x4xf32, #tpu.memory_space<vmem>>, %arg4: memref<9x4x4xf32, #tpu.memory_space<vmem>>, %arg5: memref<8x4xf32, #tpu.memory_space<vmem>>, %arg6: memref<8x512xf32, #tpu.memory_space<vmem>>) attributes {dimension_semantics = [#tpu.dimension_semantics<parallel>], iteration_bounds = array<i64: 1>, scalar_prefetch = 0 : i64, scratch_operands = 0 : i64, tpu.core_type = #tpu.core_type<tc>, window_params = [{transform_indices = @transform_0, window_bounds = array<i64: 3>}, {transform_indices = @transform_1, window_bounds = array<i64: 4, 512>}, {pipeline_mode = #tpu.pipeline_mode<synchronous>, transform_indices = @transform_2, window_bounds = array<i64: 12, 4>}, {pipeline_mode = #tpu.pipeline_mode<synchronous>, transform_indices = @transform_3, window_bounds = array<i64: 9, 4, 4>}, {pipeline_mode = #tpu.pipeline_mode<synchronous>, transform_indices = @transform_4, window_bounds = array<i64: 8, 4>}, {transform_indices = @transform_5, window_bounds = array<i64: 8, 512>}]} {
    %c0 = arith.constant 0 : index
    %0 = memref.load %arg1[%c0] : memref<3xf32, #tpu.memory_space<smem>>
    %c1 = arith.constant 1 : index
    %1 = memref.load %arg1[%c1] : memref<3xf32, #tpu.memory_space<smem>>
    %c2 = arith.constant 2 : index
    %2 = memref.load %arg1[%c2] : memref<3xf32, #tpu.memory_space<smem>>
    %c0_0 = arith.constant 0 : index
    %c0_1 = arith.constant 0 : index
    %3 = vector.load %arg2[%c0_0, %c0_1] : memref<4x512xf32, #tpu.memory_space<vmem>>, vector<4x512xf32>
    %c0_2 = arith.constant 0 : index
    %c0_3 = arith.constant 0 : index
    %4 = vector.load %arg3[%c0_2, %c0_3] : memref<12x4xf32, #tpu.memory_space<vmem>>, vector<12x4xf32>
    %cst = arith.constant dense<0.000000e+00> : vector<12x512xf32>
    %5 = tpu.matmul %4, %3, %cst {dimension_numbers = #tpu.dot_dimension_numbers<[1], [0], [0], [1], [0, 0, 1, 1], [], []>} : vector<12x4xf32>, vector<4x512xf32>, vector<12x512xf32> -> vector<12x512xf32>
    %6 = vector.extract_strided_slice %5 {offsets = [0, 0], sizes = [8, 512], strides = [1, 1]} : vector<12x512xf32> to vector<8x512xf32>
    %7 = vector.extract_strided_slice %5 {offsets = [8, 0], sizes = [4, 512], strides = [1, 1]} : vector<12x512xf32> to vector<4x512xf32>
    %cst_4 = arith.constant 0.000000e+00 : f32
    %8 = vector.broadcast %cst_4 : f32 to vector<4x512xf32>
    %9 = arith.cmpf oge, %7, %8 : vector<4x512xf32>
    %10 = vector.broadcast %0 : f32 to vector<4x512xf32>
    %11 = arith.mulf %10, %7 : vector<4x512xf32>
    %12 = arith.select %9, %7, %11 : vector<4x512xi1>, vector<4x512xf32>
    %13 = tpu.iota {dimensions = array<i32: 1>} : vector<1x512xi32>
    %c16_i32 = arith.constant 16 : i32
    %c0_i32 = arith.constant 0 : i32
    %14 = arith.cmpi eq, %c16_i32, %c0_i32 : i32
    %c1_i32 = arith.constant 1 : i32
    %15 = arith.select %14, %c1_i32, %c16_i32 : i32
    %16 = vector.broadcast %15 : i32 to vector<1x512xi32>
    %17 = arith.remsi %13, %16 : vector<1x512xi32>
    %c0_i32_5 = arith.constant 0 : i32
    %18 = vector.broadcast %c0_i32_5 : i32 to vector<1x512xi32>
    %19 = arith.cmpi ne, %17, %18 : vector<1x512xi32>
    %c0_i32_6 = arith.constant 0 : i32
    %20 = vector.broadcast %c0_i32_6 : i32 to vector<1x512xi32>
    %21 = arith.cmpi slt, %17, %20 : vector<1x512xi32>
    %c0_i32_7 = arith.constant 0 : i32
    %22 = arith.cmpi slt, %15, %c0_i32_7 : i32
    %23 = vector.broadcast %22 : i1 to vector<1x512xi1>
    %24 = vector.broadcast %23 : vector<1x512xi1> to vector<1x512xi1>
    %25 = arith.xori %21, %24 : vector<1x512xi1>
    %26 = arith.andi %25, %19 : vector<1x512xi1>
    %27 = vector.broadcast %15 : i32 to vector<1x512xi32>
    %28 = arith.addi %17, %27 : vector<1x512xi32>
    %29 = arith.select %26, %28, %17 : vector<1x512xi1>, vector<1x512xi32>
    %c256_i32 = arith.constant 256 : i32
    %c0_i32_8 = arith.constant 0 : i32
    %30 = arith.cmpi eq, %c256_i32, %c0_i32_8 : i32
    %c1_i32_9 = arith.constant 1 : i32
    %31 = arith.select %30, %c1_i32_9, %c256_i32 : i32
    %32 = vector.broadcast %31 : i32 to vector<1x512xi32>
    %33 = arith.remsi %13, %32 : vector<1x512xi32>
    %c0_i32_10 = arith.constant 0 : i32
    %34 = vector.broadcast %c0_i32_10 : i32 to vector<1x512xi32>
    %35 = arith.cmpi ne, %33, %34 : vector<1x512xi32>
    %c0_i32_11 = arith.constant 0 : i32
    %36 = vector.broadcast %c0_i32_11 : i32 to vector<1x512xi32>
    %37 = arith.cmpi slt, %33, %36 : vector<1x512xi32>
    %c0_i32_12 = arith.constant 0 : i32
    %38 = arith.cmpi slt, %31, %c0_i32_12 : i32
    %39 = vector.broadcast %38 : i1 to vector<1x512xi1>
    %40 = vector.broadcast %39 : vector<1x512xi1> to vector<1x512xi1>
    %41 = arith.xori %37, %40 : vector<1x512xi1>
    %42 = arith.andi %41, %35 : vector<1x512xi1>
    %43 = vector.broadcast %31 : i32 to vector<1x512xi32>
    %44 = arith.addi %33, %43 : vector<1x512xi32>
    %45 = arith.select %42, %44, %33 : vector<1x512xi1>, vector<1x512xi32>
    %c1_i32_13 = arith.constant 1 : i32
    %46 = vector.broadcast %c1_i32_13 : i32 to vector<1x512xi32>
    %47 = arith.cmpi sge, %29, %46 : vector<1x512xi32>
    %48 = arith.extui %47 : vector<1x512xi1> to vector<1x512xi32>
    %49 = arith.sitofp %48 : vector<1x512xi32> to vector<1x512xf32>
    %c14_i32 = arith.constant 14 : i32
    %50 = vector.broadcast %c14_i32 : i32 to vector<1x512xi32>
    %51 = arith.cmpi sle, %29, %50 : vector<1x512xi32>
    %52 = arith.extui %51 : vector<1x512xi1> to vector<1x512xi32>
    %53 = arith.sitofp %52 : vector<1x512xi32> to vector<1x512xf32>
    %c16_i32_14 = arith.constant 16 : i32
    %54 = vector.broadcast %c16_i32_14 : i32 to vector<1x512xi32>
    %55 = arith.cmpi sge, %45, %54 : vector<1x512xi32>
    %56 = arith.extui %55 : vector<1x512xi1> to vector<1x512xi32>
    %57 = arith.sitofp %56 : vector<1x512xi32> to vector<1x512xf32>
    %c240_i32 = arith.constant 240 : i32
    %58 = vector.broadcast %c240_i32 : i32 to vector<1x512xi32>
    %59 = arith.cmpi slt, %45, %58 : vector<1x512xi32>
    %60 = arith.extui %59 : vector<1x512xi1> to vector<1x512xi32>
    %61 = arith.sitofp %60 : vector<1x512xi32> to vector<1x512xf32>
    %c17_i32 = arith.constant 17 : i32
    %62 = tpu.dynamic_rotate %12 by %c17_i32 dim 1 : vector<4x512xf32>, i32 -> vector<4x512xf32>
    %63 = arith.mulf %57, %49 : vector<1x512xf32>
    %64 = vector.broadcast %63 : vector<1x512xf32> to vector<4x512xf32>
    %65 = arith.mulf %62, %64 : vector<4x512xf32>
    %c0_15 = arith.constant 0 : index
    %c0_16 = arith.constant 0 : index
    %c0_17 = arith.constant 0 : index
    %66 = vector.load %arg4[%c0_15, %c0_16, %c0_17] : memref<9x4x4xf32, #tpu.memory_space<vmem>>, vector<1x4x4xf32>
    %67 = vector.shape_cast %66 : vector<1x4x4xf32> to vector<4x4xf32>
    %cst_18 = arith.constant dense<0.000000e+00> : vector<4x512xf32>
    %68 = tpu.matmul %67, %65, %cst_18 {dimension_numbers = #tpu.dot_dimension_numbers<[1], [0], [0], [1], [0, 0, 1, 1], [], []>} : vector<4x4xf32>, vector<4x512xf32>, vector<4x512xf32> -> vector<4x512xf32>
    %c16_i32_19 = arith.constant 16 : i32
    %69 = tpu.dynamic_rotate %12 by %c16_i32_19 dim 1 : vector<4x512xf32>, i32 -> vector<4x512xf32>
    %70 = vector.broadcast %57 : vector<1x512xf32> to vector<4x512xf32>
    %71 = arith.mulf %69, %70 : vector<4x512xf32>
    %c1_20 = arith.constant 1 : index
    %c0_21 = arith.constant 0 : index
    %c0_22 = arith.constant 0 : index
    %72 = vector.load %arg4[%c1_20, %c0_21, %c0_22] : memref<9x4x4xf32, #tpu.memory_space<vmem>>, vector<1x4x4xf32>
    %73 = vector.shape_cast %72 : vector<1x4x4xf32> to vector<4x4xf32>
    %cst_23 = arith.constant dense<0.000000e+00> : vector<4x512xf32>
    %74 = tpu.matmul %73, %71, %cst_23 {dimension_numbers = #tpu.dot_dimension_numbers<[1], [0], [0], [1], [0, 0, 1, 1], [], []>} : vector<4x4xf32>, vector<4x512xf32>, vector<4x512xf32> -> vector<4x512xf32>
    %75 = arith.addf %68, %74 : vector<4x512xf32>
    %c15_i32 = arith.constant 15 : i32
    %76 = tpu.dynamic_rotate %12 by %c15_i32 dim 1 : vector<4x512xf32>, i32 -> vector<4x512xf32>
    %77 = arith.mulf %57, %53 : vector<1x512xf32>
    %78 = vector.broadcast %77 : vector<1x512xf32> to vector<4x512xf32>
    %79 = arith.mulf %76, %78 : vector<4x512xf32>
    %c2_24 = arith.constant 2 : index
    %c0_25 = arith.constant 0 : index
    %c0_26 = arith.constant 0 : index
    %80 = vector.load %arg4[%c2_24, %c0_25, %c0_26] : memref<9x4x4xf32, #tpu.memory_space<vmem>>, vector<1x4x4xf32>
    %81 = vector.shape_cast %80 : vector<1x4x4xf32> to vector<4x4xf32>
    %cst_27 = arith.constant dense<0.000000e+00> : vector<4x512xf32>
    %82 = tpu.matmul %81, %79, %cst_27 {dimension_numbers = #tpu.dot_dimension_numbers<[1], [0], [0], [1], [0, 0, 1, 1], [], []>} : vector<4x4xf32>, vector<4x512xf32>, vector<4x512xf32> -> vector<4x512xf32>
    %83 = arith.addf %75, %82 : vector<4x512xf32>
    %c1_i32_28 = arith.constant 1 : i32
    %84 = tpu.dynamic_rotate %12 by %c1_i32_28 dim 1 : vector<4x512xf32>, i32 -> vector<4x512xf32>
    %85 = vector.broadcast %49 : vector<1x512xf32> to vector<4x512xf32>
    %86 = arith.mulf %84, %85 : vector<4x512xf32>
    %c3 = arith.constant 3 : index
    %c0_29 = arith.constant 0 : index
    %c0_30 = arith.constant 0 : index
    %87 = vector.load %arg4[%c3, %c0_29, %c0_30] : memref<9x4x4xf32, #tpu.memory_space<vmem>>, vector<1x4x4xf32>
    %88 = vector.shape_cast %87 : vector<1x4x4xf32> to vector<4x4xf32>
    %cst_31 = arith.constant dense<0.000000e+00> : vector<4x512xf32>
    %89 = tpu.matmul %88, %86, %cst_31 {dimension_numbers = #tpu.dot_dimension_numbers<[1], [0], [0], [1], [0, 0, 1, 1], [], []>} : vector<4x4xf32>, vector<4x512xf32>, vector<4x512xf32> -> vector<4x512xf32>
    %90 = arith.addf %83, %89 : vector<4x512xf32>
    %c4 = arith.constant 4 : index
    %c0_32 = arith.constant 0 : index
    %c0_33 = arith.constant 0 : index
    %91 = vector.load %arg4[%c4, %c0_32, %c0_33] : memref<9x4x4xf32, #tpu.memory_space<vmem>>, vector<1x4x4xf32>
    %92 = vector.shape_cast %91 : vector<1x4x4xf32> to vector<4x4xf32>
    %cst_34 = arith.constant dense<0.000000e+00> : vector<4x512xf32>
    %93 = tpu.matmul %92, %12, %cst_34 {dimension_numbers = #tpu.dot_dimension_numbers<[1], [0], [0], [1], [0, 0, 1, 1], [], []>} : vector<4x4xf32>, vector<4x512xf32>, vector<4x512xf32> -> vector<4x512xf32>
    %94 = arith.addf %90, %93 : vector<4x512xf32>
    %c511_i32 = arith.constant 511 : i32
    %95 = tpu.dynamic_rotate %12 by %c511_i32 dim 1 : vector<4x512xf32>, i32 -> vector<4x512xf32>
    %96 = vector.broadcast %53 : vector<1x512xf32> to vector<4x512xf32>
    %97 = arith.mulf %95, %96 : vector<4x512xf32>
    %c5 = arith.constant 5 : index
    %c0_35 = arith.constant 0 : index
    %c0_36 = arith.constant 0 : index
    %98 = vector.load %arg4[%c5, %c0_35, %c0_36] : memref<9x4x4xf32, #tpu.memory_space<vmem>>, vector<1x4x4xf32>
    %99 = vector.shape_cast %98 : vector<1x4x4xf32> to vector<4x4xf32>
    %cst_37 = arith.constant dense<0.000000e+00> : vector<4x512xf32>
    %100 = tpu.matmul %99, %97, %cst_37 {dimension_numbers = #tpu.dot_dimension_numbers<[1], [0], [0], [1], [0, 0, 1, 1], [], []>} : vector<4x4xf32>, vector<4x512xf32>, vector<4x512xf32> -> vector<4x512xf32>
    %101 = arith.addf %94, %100 : vector<4x512xf32>
    %c497_i32 = arith.constant 497 : i32
    %102 = tpu.dynamic_rotate %12 by %c497_i32 dim 1 : vector<4x512xf32>, i32 -> vector<4x512xf32>
    %103 = arith.mulf %61, %49 : vector<1x512xf32>
    %104 = vector.broadcast %103 : vector<1x512xf32> to vector<4x512xf32>
    %105 = arith.mulf %102, %104 : vector<4x512xf32>
    %c6 = arith.constant 6 : index
    %c0_38 = arith.constant 0 : index
    %c0_39 = arith.constant 0 : index
    %106 = vector.load %arg4[%c6, %c0_38, %c0_39] : memref<9x4x4xf32, #tpu.memory_space<vmem>>, vector<1x4x4xf32>
    %107 = vector.shape_cast %106 : vector<1x4x4xf32> to vector<4x4xf32>
    %cst_40 = arith.constant dense<0.000000e+00> : vector<4x512xf32>
    %108 = tpu.matmul %107, %105, %cst_40 {dimension_numbers = #tpu.dot_dimension_numbers<[1], [0], [0], [1], [0, 0, 1, 1], [], []>} : vector<4x4xf32>, vector<4x512xf32>, vector<4x512xf32> -> vector<4x512xf32>
    %109 = arith.addf %101, %108 : vector<4x512xf32>
    %c496_i32 = arith.constant 496 : i32
    %110 = tpu.dynamic_rotate %12 by %c496_i32 dim 1 : vector<4x512xf32>, i32 -> vector<4x512xf32>
    %111 = vector.broadcast %61 : vector<1x512xf32> to vector<4x512xf32>
    %112 = arith.mulf %110, %111 : vector<4x512xf32>
    %c7 = arith.constant 7 : index
    %c0_41 = arith.constant 0 : index
    %c0_42 = arith.constant 0 : index
    %113 = vector.load %arg4[%c7, %c0_41, %c0_42] : memref<9x4x4xf32, #tpu.memory_space<vmem>>, vector<1x4x4xf32>
    %114 = vector.shape_cast %113 : vector<1x4x4xf32> to vector<4x4xf32>
    %cst_43 = arith.constant dense<0.000000e+00> : vector<4x512xf32>
    %115 = tpu.matmul %114, %112, %cst_43 {dimension_numbers = #tpu.dot_dimension_numbers<[1], [0], [0], [1], [0, 0, 1, 1], [], []>} : vector<4x4xf32>, vector<4x512xf32>, vector<4x512xf32> -> vector<4x512xf32>
    %116 = arith.addf %109, %115 : vector<4x512xf32>
    %c495_i32 = arith.constant 495 : i32
    %117 = tpu.dynamic_rotate %12 by %c495_i32 dim 1 : vector<4x512xf32>, i32 -> vector<4x512xf32>
    %118 = arith.mulf %61, %53 : vector<1x512xf32>
    %119 = vector.broadcast %118 : vector<1x512xf32> to vector<4x512xf32>
    %120 = arith.mulf %117, %119 : vector<4x512xf32>
    %c8 = arith.constant 8 : index
    %c0_44 = arith.constant 0 : index
    %c0_45 = arith.constant 0 : index
    %121 = vector.load %arg4[%c8, %c0_44, %c0_45] : memref<9x4x4xf32, #tpu.memory_space<vmem>>, vector<1x4x4xf32>
    %122 = vector.shape_cast %121 : vector<1x4x4xf32> to vector<4x4xf32>
    %cst_46 = arith.constant dense<0.000000e+00> : vector<4x512xf32>
    %123 = tpu.matmul %122, %120, %cst_46 {dimension_numbers = #tpu.dot_dimension_numbers<[1], [0], [0], [1], [0, 0, 1, 1], [], []>} : vector<4x4xf32>, vector<4x512xf32>, vector<4x512xf32> -> vector<4x512xf32>
    %124 = arith.addf %116, %123 : vector<4x512xf32>
    %cst_47 = arith.constant 0.000000e+00 : f32
    %125 = vector.broadcast %cst_47 : f32 to vector<4x512xf32>
    %126 = arith.cmpf oge, %124, %125 : vector<4x512xf32>
    %127 = vector.broadcast %1 : f32 to vector<4x512xf32>
    %128 = arith.mulf %127, %124 : vector<4x512xf32>
    %129 = arith.select %126, %124, %128 : vector<4x512xi1>, vector<4x512xf32>
    %c0_48 = arith.constant 0 : index
    %c0_49 = arith.constant 0 : index
    %130 = vector.load %arg5[%c0_48, %c0_49] : memref<8x4xf32, #tpu.memory_space<vmem>>, vector<8x4xf32>
    %cst_50 = arith.constant dense<0.000000e+00> : vector<8x512xf32>
    %131 = tpu.matmul %130, %129, %cst_50 {dimension_numbers = #tpu.dot_dimension_numbers<[1], [0], [0], [1], [0, 0, 1, 1], [], []>} : vector<8x4xf32>, vector<4x512xf32>, vector<8x512xf32> -> vector<8x512xf32>
    %132 = arith.addf %131, %6 : vector<8x512xf32>
    %cst_51 = arith.constant 0.000000e+00 : f32
    %133 = vector.broadcast %cst_51 : f32 to vector<8x512xf32>
    %134 = arith.cmpf oge, %132, %133 : vector<8x512xf32>
    %135 = vector.broadcast %2 : f32 to vector<8x512xf32>
    %136 = arith.mulf %135, %132 : vector<8x512xf32>
    %137 = arith.select %134, %132, %136 : vector<8x512xi1>, vector<8x512xf32>
    %c0_52 = arith.constant 0 : index
    %c0_53 = arith.constant 0 : index
    %138 = vector.load %arg6[%c0_52, %c0_53] : memref<8x512xf32, #tpu.memory_space<vmem>>, vector<8x512xf32>
    tpu.vector_store %arg6[%c0_52, %c0_53], %137 {strides = array<i32>} : memref<8x512xf32, #tpu.memory_space<vmem>>, vector<8x512xf32>,
    return
  }
  func.func @transform_0(%arg0: i32) -> i32 {
    %c0_i32 = arith.constant 0 : i32
    %c0_i32_0 = arith.constant 0 : i32
    return %c0_i32 : i32
  }
  func.func @transform_1(%arg0: i32) -> (i32, i32) {
    %c0_i32 = arith.constant 0 : i32
    %c0_i32_0 = arith.constant 0 : i32
    return %c0_i32, %arg0 : i32, i32
  }
  func.func @transform_2(%arg0: i32) -> (i32, i32) {
    %c0_i32 = arith.constant 0 : i32
    %c0_i32_0 = arith.constant 0 : i32
    %c0_i32_1 = arith.constant 0 : i32
    return %c0_i32, %c0_i32_0 : i32, i32
  }
  func.func @transform_3(%arg0: i32) -> (i32, i32, i32) {
    %c0_i32 = arith.constant 0 : i32
    %c0_i32_0 = arith.constant 0 : i32
    %c0_i32_1 = arith.constant 0 : i32
    %c0_i32_2 = arith.constant 0 : i32
    return %c0_i32, %c0_i32_0, %c0_i32_1 : i32, i32, i32
  }
  func.func @transform_4(%arg0: i32) -> (i32, i32) {
    %c0_i32 = arith.constant 0 : i32
    %c0_i32_0 = arith.constant 0 : i32
    %c0_i32_1 = arith.constant 0 : i32
    return %c0_i32, %c0_i32_0 : i32, i32
  }
  func.func @transform_5(%arg0: i32) -> (i32, i32) {
    %c0_i32 = arith.constant 0 : i32
    %c0_i32_0 = arith.constant 0 : i32
    return %c0_i32, %arg0 : i32, i32
  }
}

</mosaic_0001>

<llo_original>
// kernel: tpu_custom_call.1
$region0: #{tpu_custom_call.1}
  #allocation0 [shape = 'u32[]', space=smem, size = 0x4, offset = 0x4, fixed_abs, tag = 'smem constant byte address 0x4 - core index']
  #allocation1 [shape = 'u32[144,128]{1,0:T(1,128)}', space=vmem, size = 0x12000, scoped, tag = 'internal scratch']
  %s0 = inlined_call_operand.vmem [shape: f32[3], index: 0, kind: input, shape index: {}]
  %s1 = inlined_call_operand.vmem [shape: f32[4,512], index: 1, kind: input, shape index: {}]
  %s2 = inlined_call_operand.vmem [shape: f32[12,4], index: 2, kind: input, shape index: {}]
  %s3 = inlined_call_operand.vmem [shape: f32[9,4,4], index: 3, kind: input, shape index: {}]
  %s4 = inlined_call_operand.vmem [shape: f32[8,4], index: 4, kind: input, shape index: {}]
  %s5 = inlined_call_operand.hbm [shape: f32[8,512], index: 5, kind: output, shape index: {}]
  %s6 = sld [smem:[#allocation0]]
  $region34: #{tpu_custom_call.1} parent=0
    _
  %s8 = ssub.s32 1, %s6
  %s9 = scalar_select 0, %s8, %s6
  $region1: #{tpu_custom_call.1} parent=0
    #allocation2 [shape = 'u8[512]{0}', space=smem, size = 0x200, scoped, tag = 'input window, operand 0, single buffered']
    #allocation3 [shape = 's32[1]{0}', space=sflag, size = 0x4, scoped, tag = 'scoped memory for tpu_custom_call.1']
    #allocation4 [shape = 's32[1]{0}', space=sflag, size = 0x4, scoped, tag = 'scoped memory for tpu_custom_call.1']
    #allocation5 [shape = 'u8[16384]{0}', space=vmem, size = 0x4000, scoped, tag = 'output window, operand 0, single buffered']
    %10 = vsyncpa [#allocation4], 0
    %11 = vsyncpa [#allocation3], 0
    // Predicated region
    $region2: #{tpu_custom_call.1} parent=1 // pred_check
      _
    $region3: #{tpu_custom_call.1} parent=1 // pred_check_branch
      %13 = sbr.rel (0) target = $region5
    $region4: #{tpu_custom_call.1} parent=1 // pred_region
      %s15 = ssub.s32 16, 16
      %16 = vsyncadd [#allocation4], %s15
      %s18 = sshll.u32 %s0, 4
      %s19 = int_to_ptr.vmem [resolvable:$true] %s18
      %21 = dma.vmem_to_smem %s19, 16, [#allocation2], [#allocation4]
    $region5: #{tpu_custom_call.1} parent=1 // pred_fallthru
      _
    // Predicated region
    $region6: #{tpu_custom_call.1} parent=1 // pred_check
      _
    $region7: #{tpu_custom_call.1} parent=1 // pred_check_branch
      %23 = sbr.rel (0) target = $region9
    $region8: #{tpu_custom_call.1} parent=1 // pred_region
      _
    $region9: #{tpu_custom_call.1} parent=1 // pred_fallthru
      _
    // Predicated region
    $region10: #{tpu_custom_call.1} parent=1 // pred_check
      _
    $region11: #{tpu_custom_call.1} parent=1 // pred_check_branch
      %25 = sbr.rel (0) target = $region13
    $region12: #{tpu_custom_call.1} parent=1 // pred_region
      _
    $region13: #{tpu_custom_call.1} parent=1 // pred_fallthru
      _
    // Predicated region
    $region14: #{tpu_custom_call.1} parent=1 // pred_check
      _
    $region15: #{tpu_custom_call.1} parent=1 // pred_check_branch
      %27 = sbr.rel (0) target = $region17
    $region16: #{tpu_custom_call.1} parent=1 // pred_region
      _
    $region17: #{tpu_custom_call.1} parent=1 // pred_fallthru
      _
    // Predicated region
    $region18: #{tpu_custom_call.1} parent=1 // pred_check
      _
    $region19: #{tpu_custom_call.1} parent=1 // pred_check_branch
      %29 = sbr.rel (0) target = $region21
    $region20: #{tpu_custom_call.1} parent=1 // pred_region
      _
    $region21: #{tpu_custom_call.1} parent=1 // pred_fallthru
      _
    // Predicated region
    $region22: #{tpu_custom_call.1} parent=1 // pred_check
      _
    $region23: #{tpu_custom_call.1} parent=1 // pred_check_branch
      %31 = sbr.rel (0) target = $region25
    $region24: #{tpu_custom_call.1} parent=1 // pred_region
      %32 = dma.done [#allocation4], 16
    $region25: #{tpu_custom_call.1} parent=1 // pred_fallthru
      _
    %33 = sfence
    %s34 = sld [smem:[#allocation2]]
    %s35 = sld [smem:[#allocation2 + $0x1]]
    %s36 = sld [smem:[#allocation2 + $0x2]]
    %v37 = vld [vmem:[%s1] sm:$0xff]
    %v38 = vld [vmem:[%s1 + $0x8] sm:$0xff]
    %v39 = vld [vmem:[%s2] sm:$0xff]
    %v40 = vld [vmem:[%s2 + $0x8] sm:$0xf]
    %v43 = vcombine.high %v37, %v37
    %v44 = vcombine.high %v38, %v38
    %vm45 = vcmask 31744
    %v47 = vsel %vm45, %v39, 0
    %v50 = vsel %vm45, %v40, 0
    %vm52 = vcmask 1043456
    %v53 = vsel %vm52, %v37, 0
    %v55 = vsel %vm52, %v43, 0
    %v57 = vsel %vm52, %v38, 0
    %v59 = vsel %vm52, %v44, 0
    %61 = vmatprep.subr.mxu0 0.0
    %62 = vmatpush1.msra.mxu0 0.0
    %63 = vmatprep.subr.mxu0 0.0
    %64 = vmatpush1.msra.mxu0 0.0
    %65 = vmatprep.subr.mxu0 0.0
    %66 = vmatpush1.msra.mxu0 0.0
    %67 = vmatprep.subr.mxu0 0.0
    %68 = vmatpush1.msra.mxu0 0.0
    %69 = vmatprep.subr.mxu0 0.0
    %70 = vmatpush1.msra.mxu0 0.0
    %71 = vmatprep.subr.mxu0 0.0
    %72 = vmatpush1.msra.mxu0 0.0
    %73 = vmatprep.subr.mxu0 0.0
    %74 = vmatpush1.msra.mxu0 0.0
    %75 = vmatprep.subr.mxu0 0.0
    %76 = vmatpush1.msra.mxu0 0.0
    %77 = vmatprep.subr.mxu0 0.0
    %78 = vmatpush1.msra.mxu0 0.0
    %79 = vmatprep.subr.mxu0 0.0
    %80 = vmatpush1.msra.mxu0 0.0
    %81 = vmatprep.subr.mxu0 0.0
    %82 = vmatpush1.msra.mxu0 0.0
    %83 = vmatprep.subr.mxu0 0.0
    %84 = vmatpush1.msra.mxu0 0.0
    %85 = vmatprep.subr.mxu0 0.0
    %86 = vmatpush1.msra.mxu0 0.0
    %87 = vmatprep.subr.mxu0 0.0
    %88 = vmatpush1.msra.mxu0 0.0
    %89 = vmatprep.subr.mxu0 0.0
    %90 = vmatpush1.msra.mxu0 0.0
    %91 = vmatprep.subr.mxu0 %v55
    %92 = vmatpush1.msra.mxu0 %v53
    %93 = vmatprep.subr.mxu0 0.0
    %94 = vmatpush2.msra.mxu0 0.0
    %95 = vmatprep.subr.mxu0 0.0
    %96 = vmatpush2.msra.mxu0 0.0
    %97 = vmatprep.subr.mxu0 0.0
    %98 = vmatpush2.msra.mxu0 0.0
    %99 = vmatprep.subr.mxu0 0.0
    %100 = vmatpush2.msra.mxu0 0.0
    %101 = vmatprep.subr.mxu0 0.0
    %102 = vmatpush2.msra.mxu0 0.0
    %103 = vmatprep.subr.mxu0 0.0
    %104 = vmatpush2.msra.mxu0 0.0
    %105 = vmatprep.subr.mxu0 0.0
    %106 = vmatpush2.msra.mxu0 0.0
    %107 = vmatprep.subr.mxu0 0.0
    %108 = vmatpush2.msra.mxu0 0.0
    %109 = vmatprep.subr.mxu0 0.0
    %110 = vmatpush2.msra.mxu0 0.0
    %111 = vmatprep.subr.mxu0 0.0
    %112 = vmatpush2.msra.mxu0 0.0
    %113 = vmatprep.subr.mxu0 0.0
    %114 = vmatpush2.msra.mxu0 0.0
    %115 = vmatprep.subr.mxu0 0.0
    %116 = vmatpush2.msra.mxu0 0.0
    %117 = vmatprep.subr.mxu0 0.0
    %118 = vmatpush2.msra.mxu0 0.0
    %119 = vmatprep.subr.mxu0 0.0
    %120 = vmatpush2.msra.mxu0 0.0
    %121 = vmatprep.subr.mxu0 0.0
    %122 = vmatpush2.msra.mxu0 0.0
    %123 = vmatprep.subr.mxu0 0.0
    %124 = vmatpush2.msra.mxu0 0.0
    %125 = vmatprep.mubr.f32.mxu0 0.0
    %126 = vmatmul.mubr.f32.gmra.mxu0 %v47
    %v127 = vpop.f32.mrf.mxu0
    %v128 = vadd.f32 0.0, %v127
    %v129 = vpop.f32.mrf.mxu0
    %v130 = vadd.f32 0.0, %v129
    %131 = vmatprep.mubr.f32.mxu0 0.0
    %132 = vmatmul.mubr.f32.gmra.mxu0 %v50
    %v133 = vpop.f32.mrf.mxu0
    %v134 = vadd.f32 0.0, %v133
    %v135 = vpop.f32.mrf.mxu0
    %v136 = vadd.f32 0.0, %v135
    %137 = vdwg.mxu0
    %138 = vmatprep.subr.mxu0 0.0
    %139 = vmatpush1.msra.mxu0 0.0
    %140 = vmatprep.subr.mxu0 0.0
    %141 = vmatpush1.msra.mxu0 0.0
    %142 = vmatprep.subr.mxu0 0.0
    %143 = vmatpush1.msra.mxu0 0.0
    %144 = vmatprep.subr.mxu0 0.0
    %145 = vmatpush1.msra.mxu0 0.0
    %146 = vmatprep.subr.mxu0 0.0
    %147 = vmatpush1.msra.mxu0 0.0
    %148 = vmatprep.subr.mxu0 0.0
    %149 = vmatpush1.msra.mxu0 0.0
    %150 = vmatprep.subr.mxu0 0.0
    %151 = vmatpush1.msra.mxu0 0.0
    %152 = vmatprep.subr.mxu0 0.0
    %153 = vmatpush1.msra.mxu0 0.0
    %154 = vmatprep.subr.mxu0 0.0
    %155 = vmatpush1.msra.mxu0 0.0
    %156 = vmatprep.subr.mxu0 0.0
    %157 = vmatpush1.msra.mxu0 0.0
    %158 = vmatprep.subr.mxu0 0.0
    %159 = vmatpush1.msra.mxu0 0.0
    %160 = vmatprep.subr.mxu0 0.0
    %161 = vmatpush1.msra.mxu0 0.0
    %162 = vmatprep.subr.mxu0 0.0
    %163 = vmatpush1.msra.mxu0 0.0
    %164 = vmatprep.subr.mxu0 0.0
    %165 = vmatpush1.msra.mxu0 0.0
    %166 = vmatprep.subr.mxu0 0.0
    %167 = vmatpush1.msra.mxu0 0.0
    %168 = vmatprep.subr.mxu0 %v59
    %169 = vmatpush1.msra.mxu0 %v57
    %170 = vmatprep.subr.mxu0 0.0
    %171 = vmatpush2.msra.mxu0 0.0
    %172 = vmatprep.subr.mxu0 0.0
    %173 = vmatpush2.msra.mxu0 0.0
    %174 = vmatprep.subr.mxu0 0.0
    %175 = vmatpush2.msra.mxu0 0.0
    %176 = vmatprep.subr.mxu0 0.0
    %177 = vmatpush2.msra.mxu0 0.0
    %178 = vmatprep.subr.mxu0 0.0
    %179 = vmatpush2.msra.mxu0 0.0
    %180 = vmatprep.subr.mxu0 0.0
    %181 = vmatpush2.msra.mxu0 0.0
    %182 = vmatprep.subr.mxu0 0.0
    %183 = vmatpush2.msra.mxu0 0.0
    %184 = vmatprep.subr.mxu0 0.0
    %185 = vmatpush2.msra.mxu0 0.0
    %186 = vmatprep.subr.mxu0 0.0
    %187 = vmatpush2.msra.mxu0 0.0
    %188 = vmatprep.subr.mxu0 0.0
    %189 = vmatpush2.msra.mxu0 0.0
    %190 = vmatprep.subr.mxu0 0.0
    %191 = vmatpush2.msra.mxu0 0.0
    %192 = vmatprep.subr.mxu0 0.0
    %193 = vmatpush2.msra.mxu0 0.0
    %194 = vmatprep.subr.mxu0 0.0
    %195 = vmatpush2.msra.mxu0 0.0
    %196 = vmatprep.subr.mxu0 0.0
    %197 = vmatpush2.msra.mxu0 0.0
    %198 = vmatprep.subr.mxu0 0.0
    %199 = vmatpush2.msra.mxu0 0.0
    %200 = vmatprep.subr.mxu0 0.0
    %201 = vmatpush2.msra.mxu0 0.0
    %202 = vmatprep.mubr.f32.mxu0 0.0
    %203 = vmatmul.mubr.f32.gmra.mxu0 %v47
    %v204 = vpop.f32.mrf.mxu0
    %v205 = vadd.f32 0.0, %v204
    %v206 = vpop.f32.mrf.mxu0
    %v207 = vadd.f32 0.0, %v206
    %208 = vmatprep.mubr.f32.mxu0 0.0
    %209 = vmatmul.mubr.f32.gmra.mxu0 %v50
    %v210 = vpop.f32.mrf.mxu0
    %v211 = vadd.f32 0.0, %v210
    %v212 = vpop.f32.mrf.mxu0
    %v213 = vadd.f32 0.0, %v212
    %214 = vdwg.mxu0
    %vm215 = vcmp.ge.f32.partialorder %v134, 0.0
    %vm216 = vcmp.ge.f32.partialorder %v136, 0.0
    %vm217 = vcmp.ge.f32.partialorder %v211, 0.0
    %vm218 = vcmp.ge.f32.partialorder %v213, 0.0
    %v219 = vstv %s34
    %v220 = vmul.f32 %v219, %v134
    %v221 = vmul.f32 %v219, %v136
    %v222 = vmul.f32 %v219, %v211
    %v223 = vmul.f32 %v219, %v213
    %v224 = vsel %vm215, %v134, %v220
    %v225 = vsel %vm216, %v136, %v221
    %v226 = vsel %vm217, %v211, %v222
    %v227 = vsel %vm218, %v213, %v223
    %v228 = vlaneseq
    %v229 = vand.u32 %v228, 127
    %v230 = vadd.s32 %v229, 128
    %v231 = vadd.s32 %v229, 256
    %v232 = vadd.s32 %v229, 384
    %vm233 = vcmp.lt.s32.totalorder %v229, 0
    %v234 = vsub.s32 0, %v229
    %v235 = vsel %vm233, %v234, %v229
    %v236 = vshrl.u32 %v235, 4
    %v237 = vand.u32 %v235, 15
    %v238 = vsub.s32 0, %v237
    %v239 = vsel %vm233, %v238, %v237
    %vm240 = vcmp.lt.s32.totalorder %v230, 0
    %v241 = vsub.s32 0, %v230
    %v242 = vsel %vm240, %v241, %v230
    %v243 = vshrl.u32 %v242, 4
    %v244 = vand.u32 %v242, 15
    %v245 = vsub.s32 0, %v244
    %v246 = vsel %vm240, %v245, %v244
    %vm247 = vcmp.lt.s32.totalorder %v231, 0
    %v248 = vsub.s32 0, %v231
    %v249 = vsel %vm247, %v248, %v231
    %v250 = vshrl.u32 %v249, 4
    %v251 = vand.u32 %v249, 15
    %v252 = vsub.s32 0, %v251
    %v253 = vsel %vm247, %v252, %v251
    %vm254 = vcmp.lt.s32.totalorder %v232, 0
    %v255 = vsub.s32 0, %v232
    %v256 = vsel %vm254, %v255, %v232
    %v257 = vshrl.u32 %v256, 4
    %v258 = vand.u32 %v256, 15
    %v259 = vsub.s32 0, %v258
    %v260 = vsel %vm254, %v259, %v258
    %vm261 = vcmp.ne.s32.totalorder %v239, 0
    %vm262 = vcmp.ne.s32.totalorder %v246, 0
    %vm263 = vcmp.ne.s32.totalorder %v253, 0
    %vm264 = vcmp.ne.s32.totalorder %v260, 0
    %vm265 = vcmp.lt.s32.totalorder %v239, 0
    %vm266 = vcmp.lt.s32.totalorder %v246, 0
    %vm267 = vcmp.lt.s32.totalorder %v253, 0
    %vm268 = vcmp.lt.s32.totalorder %v260, 0
    %vm269 = vmand %vm265, %vm261
    %vm270 = vmand %vm266, %vm262
    %vm271 = vmand %vm267, %vm263
    %vm272 = vmand %vm268, %vm264
    %v273 = vadd.s32 %v239, 16
    %v274 = vadd.s32 %v246, 16
    %v275 = vadd.s32 %v253, 16
    %v276 = vadd.s32 %v260, 16
    %v277 = vsel %vm269, %v273, %v239
    %v278 = vsel %vm270, %v274, %v246
    %v279 = vsel %vm271, %v275, %v253
    %v280 = vsel %vm272, %v276, %v260
    %vm281 = vcmp.lt.s32.totalorder %v229, 0
    %v282 = vsub.s32 0, %v229
    %v283 = vsel %vm281, %v282, %v229
    %v284 = vshrl.u32 %v283, 8
    %v285 = vand.u32 %v283, 255
    %v286 = vsub.s32 0, %v285
    %v287 = vsel %vm281, %v286, %v285
    %vm288 = vcmp.lt.s32.totalorder %v230, 0
    %v289 = vsub.s32 0, %v230
    %v290 = vsel %vm288, %v289, %v230
    %v291 = vshrl.u32 %v290, 8
    %v292 = vand.u32 %v290, 255
    %v293 = vsub.s32 0, %v292
    %v294 = vsel %vm288, %v293, %v292
    %vm295 = vcmp.lt.s32.totalorder %v231, 0
    %v296 = vsub.s32 0, %v231
    %v297 = vsel %vm295, %v296, %v231
    %v298 = vshrl.u32 %v297, 8
    %v299 = vand.u32 %v297, 255
    %v300 = vsub.s32 0, %v299
    %v301 = vsel %vm295, %v300, %v299
    %vm302 = vcmp.lt.s32.totalorder %v232, 0
    %v303 = vsub.s32 0, %v232
    %v304 = vsel %vm302, %v303, %v232
    %v305 = vshrl.u32 %v304, 8
    %v306 = vand.u32 %v304, 255
    %v307 = vsub.s32 0, %v306
    %v308 = vsel %vm302, %v307, %v306
    %vm309 = vcmp.ne.s32.totalorder %v287, 0
    %vm310 = vcmp.ne.s32.totalorder %v294, 0
    %vm311 = vcmp.ne.s32.totalorder %v301, 0
    %vm312 = vcmp.ne.s32.totalorder %v308, 0
    %vm313 = vcmp.lt.s32.totalorder %v287, 0
    %vm314 = vcmp.lt.s32.totalorder %v294, 0
    %vm315 = vcmp.lt.s32.totalorder %v301, 0
    %vm316 = vcmp.lt.s32.totalorder %v308, 0
    %vm317 = vmand %vm313, %vm309
    %vm318 = vmand %vm314, %vm310
    %vm319 = vmand %vm315, %vm311
    %vm320 = vmand %vm316, %vm312
    %v321 = vadd.s32 %v287, 256
    %v322 = vadd.s32 %v294, 256
    %v323 = vadd.s32 %v301, 256
    %v324 = vadd.s32 %v308, 256
    %v325 = vsel %vm317, %v321, %v287
    %v326 = vsel %vm318, %v322, %v294
    %v327 = vsel %vm319, %v323, %v301
    %v328 = vsel %vm320, %v324, %v308
    %vm329 = vcmp.ge.s32.totalorder %v277, 1
    %vm330 = vcmp.ge.s32.totalorder %v278, 1
    %vm331 = vcmp.ge.s32.totalorder %v279, 1
    %vm332 = vcmp.ge.s32.totalorder %v280, 1
    %v333 = vsel %vm329, 1, 0
    %v334 = vsel %vm330, 1, 0
    %v335 = vsel %vm331, 1, 0
    %v336 = vsel %vm332, 1, 0
    %v337 = vcvt.s32.f32 %v333
    %v338 = vcvt.s32.f32 %v334
    %v339 = vcvt.s32.f32 %v335
    %v340 = vcvt.s32.f32 %v336
    %vm341 = vcmp.le.s32.totalorder %v277, 14
    %vm342 = vcmp.le.s32.totalorder %v278, 14
    %vm343 = vcmp.le.s32.totalorder %v279, 14
    %vm344 = vcmp.le.s32.totalorder %v280, 14
    %v345 = vsel %vm341, 1, 0
    %v346 = vsel %vm342, 1, 0
    %v347 = vsel %vm343, 1, 0
    %v348 = vsel %vm344, 1, 0
    %v349 = vcvt.s32.f32 %v345
    %v350 = vcvt.s32.f32 %v346
    %v351 = vcvt.s32.f32 %v347
    %v352 = vcvt.s32.f32 %v348
    %vm353 = vcmp.ge.s32.totalorder %v325, 16
    %vm354 = vcmp.ge.s32.totalorder %v326, 16
    %vm355 = vcmp.ge.s32.totalorder %v327, 16
    %vm356 = vcmp.ge.s32.totalorder %v328, 16
    %v357 = vsel %vm353, 1, 0
    %v358 = vsel %vm354, 1, 0
    %v359 = vsel %vm355, 1, 0
    %v360 = vsel %vm356, 1, 0
    %v361 = vcvt.s32.f32 %v357
    %v362 = vcvt.s32.f32 %v358
    %v363 = vcvt.s32.f32 %v359
    %v364 = vcvt.s32.f32 %v360
    %vm365 = vcmp.lt.s32.totalorder %v325, 240
    %vm366 = vcmp.lt.s32.totalorder %v326, 240
    %vm367 = vcmp.lt.s32.totalorder %v327, 240
    %vm368 = vcmp.lt.s32.totalorder %v328, 240
    %v369 = vsel %vm365, 1, 0
    %v370 = vsel %vm366, 1, 0
    %v371 = vsel %vm367, 1, 0
    %v372 = vsel %vm368, 1, 0
    %v373 = vcvt.s32.f32 %v369
    %v374 = vcvt.s32.f32 %v370
    %v375 = vcvt.s32.f32 %v371
    %v376 = vcvt.s32.f32 %v372
    %377 = vrot.lane.b32.xlu0 %v224, 17
    %v378 = vpop.permute.xlu0 %377
    %379 = vrot.lane.b32.xlu0 %v225, 17
    %v380 = vpop.permute.xlu0 %379
    %381 = vrot.lane.b32.xlu0 %v226, 17
    %v382 = vpop.permute.xlu0 %381
    %383 = vrot.lane.b32.xlu0 %v227, 17
    %v384 = vpop.permute.xlu0 %383
    %vm385 = vcmp.lt.s32.totalorder %v229, 17
    %v386 = vsel %vm385, %v382, %v384
    %v387 = vsel %vm385, %v380, %v382
    %v388 = vsel %vm385, %v378, %v380
    %v389 = vsel %vm385, %v384, %v378
    %v390 = vmul.f32 %v361, %v337
    %v391 = vmul.f32 %v362, %v338
    %v392 = vmul.f32 %v363, %v339
    %v393 = vmul.f32 %v364, %v340
    %v394 = vmul.f32 %v389, %v390
    %v395 = vmul.f32 %v388, %v391
    %v396 = vmul.f32 %v387, %v392
    %v397 = vmul.f32 %v386, %v393
    %v398 = vld [vmem:[%s3] sm:$0xf]
    %399 = vrot.lane.b32.xlu0 %v224, 16
    %v400 = vpop.permute.xlu0 %399
    %401 = vrot.lane.b32.xlu0 %v225, 16
    %v402 = vpop.permute.xlu0 %401
    %403 = vrot.lane.b32.xlu0 %v226, 16
    %v404 = vpop.permute.xlu0 %403
    %405 = vrot.lane.b32.xlu0 %v227, 16
    %v406 = vpop.permute.xlu0 %405
    %vm407 = vcmp.lt.s32.totalorder %v229, 16
    %v408 = vsel %vm407, %v404, %v406
    %v409 = vsel %vm407, %v402, %v404
    %v410 = vsel %vm407, %v400, %v402
    %v411 = vsel %vm407, %v406, %v400
    %v412 = vmul.f32 %v411, %v361
    %v413 = vmul.f32 %v410, %v362
    %v414 = vmul.f32 %v409, %v363
    %v415 = vmul.f32 %v408, %v364
    %s416 = scalar_lea.vmem %s3, 4
    %v417 = vld [vmem:[%s416] sm:$0xf]
    %v419 = vsel %vm45, %v417, 0
    %v422 = vsel %vm52, %v412, 0
    %v425 = vsel %vm52, %v413, 0
    %v428 = vsel %vm52, %v414, 0
    %v431 = vsel %vm52, %v415, 0
    %433 = vmatprep.subr.mxu0 0.0
    %434 = vmatpush1.msra.mxu0 0.0
    %435 = vmatprep.subr.mxu0 0.0
    %436 = vmatpush1.msra.mxu0 0.0
    %437 = vmatprep.subr.mxu0 0.0
    %438 = vmatpush1.msra.mxu0 0.0
    %439 = vmatprep.subr.mxu0 0.0
    %440 = vmatpush1.msra.mxu0 0.0
    %441 = vmatprep.subr.mxu0 0.0
    %442 = vmatpush1.msra.mxu0 0.0
    %443 = vmatprep.subr.mxu0 0.0
    %444 = vmatpush1.msra.mxu0 0.0
    %445 = vmatprep.subr.mxu0 0.0
    %446 = vmatpush1.msra.mxu0 0.0
    %447 = vmatprep.subr.mxu0 0.0
    %448 = vmatpush1.msra.mxu0 0.0
    %449 = vmatprep.subr.mxu0 0.0
    %450 = vmatpush1.msra.mxu0 0.0
    %451 = vmatprep.subr.mxu0 0.0
    %452 = vmatpush1.msra.mxu0 0.0
    %453 = vmatprep.subr.mxu0 0.0
    %454 = vmatpush1.msra.mxu0 0.0
    %455 = vmatprep.subr.mxu0 0.0
    %456 = vmatpush1.msra.mxu0 0.0
    %457 = vmatprep.subr.mxu0 0.0
    %458 = vmatpush1.msra.mxu0 0.0
    %459 = vmatprep.subr.mxu0 0.0
    %460 = vmatpush1.msra.mxu0 0.0
    %461 = vmatprep.subr.mxu0 0.0
    %462 = vmatpush1.msra.mxu0 0.0
    %463 = vmatprep.subr.mxu0 %v425
    %464 = vmatpush1.msra.mxu0 %v422
    %465 = vmatprep.subr.mxu0 0.0
    %466 = vmatpush2.msra.mxu0 0.0
    %467 = vmatprep.subr.mxu0 0.0
    %468 = vmatpush2.msra.mxu0 0.0
    %469 = vmatprep.subr.mxu0 0.0
    %470 = vmatpush2.msra.mxu0 0.0
    %471 = vmatprep.subr.mxu0 0.0
    %472 = vmatpush2.msra.mxu0 0.0
    %473 = vmatprep.subr.mxu0 0.0
    %474 = vmatpush2.msra.mxu0 0.0
    %475 = vmatprep.subr.mxu0 0.0
    %476 = vmatpush2.msra.mxu0 0.0
    %477 = vmatprep.subr.mxu0 0.0
    %478 = vmatpush2.msra.mxu0 0.0
    %479 = vmatprep.subr.mxu0 0.0
    %480 = vmatpush2.msra.mxu0 0.0
    %481 = vmatprep.subr.mxu0 0.0
    %482 = vmatpush2.msra.mxu0 0.0
    %483 = vmatprep.subr.mxu0 0.0
    %484 = vmatpush2.msra.mxu0 0.0
    %485 = vmatprep.subr.mxu0 0.0
    %486 = vmatpush2.msra.mxu0 0.0
    %487 = vmatprep.subr.mxu0 0.0
    %488 = vmatpush2.msra.mxu0 0.0
    %489 = vmatprep.subr.mxu0 0.0
    %490 = vmatpush2.msra.mxu0 0.0
    %491 = vmatprep.subr.mxu0 0.0
    %492 = vmatpush2.msra.mxu0 0.0
    %493 = vmatprep.subr.mxu0 0.0
    %494 = vmatpush2.msra.mxu0 0.0
    %495 = vmatprep.subr.mxu0 0.0
    %496 = vmatpush2.msra.mxu0 0.0
    %497 = vmatprep.mubr.f32.mxu0 0.0
    %498 = vmatmul.mubr.f32.gmra.mxu0 %v419
    %v499 = vpop.f32.mrf.mxu0
    %v500 = vadd.f32 0.0, %v499
    %v501 = vpop.f32.mrf.mxu0
    %v502 = vadd.f32 0.0, %v501
    %503 = vdwg.mxu0
    %504 = vmatprep.subr.mxu0 0.0
    %505 = vmatpush1.msra.mxu0 0.0
    %506 = vmatprep.subr.mxu0 0.0
    %507 = vmatpush1.msra.mxu0 0.0
    %508 = vmatprep.subr.mxu0 0.0
    %509 = vmatpush1.msra.mxu0 0.0
    %510 = vmatprep.subr.mxu0 0.0
    %511 = vmatpush1.msra.mxu0 0.0
    %512 = vmatprep.subr.mxu0 0.0
    %513 = vmatpush1.msra.mxu0 0.0
    %514 = vmatprep.subr.mxu0 0.0
    %515 = vmatpush1.msra.mxu0 0.0
    %516 = vmatprep.subr.mxu0 0.0
    %517 = vmatpush1.msra.mxu0 0.0
    %518 = vmatprep.subr.mxu0 0.0
    %519 = vmatpush1.msra.mxu0 0.0
    %520 = vmatprep.subr.mxu0 0.0
    %521 = vmatpush1.msra.mxu0 0.0
    %522 = vmatprep.subr.mxu0 0.0
    %523 = vmatpush1.msra.mxu0 0.0
    %524 = vmatprep.subr.mxu0 0.0
    %525 = vmatpush1.msra.mxu0 0.0
    %526 = vmatprep.subr.mxu0 0.0
    %527 = vmatpush1.msra.mxu0 0.0
    %528 = vmatprep.subr.mxu0 0.0
    %529 = vmatpush1.msra.mxu0 0.0
    %530 = vmatprep.subr.mxu0 0.0
    %531 = vmatpush1.msra.mxu0 0.0
    %532 = vmatprep.subr.mxu0 0.0
    %533 = vmatpush1.msra.mxu0 0.0
    %534 = vmatprep.subr.mxu0 %v431
    %535 = vmatpush1.msra.mxu0 %v428
    %536 = vmatprep.subr.mxu0 0.0
    %537 = vmatpush2.msra.mxu0 0.0
    %538 = vmatprep.subr.mxu0 0.0
    %539 = vmatpush2.msra.mxu0 0.0
    %540 = vmatprep.subr.mxu0 0.0
    %541 = vmatpush2.msra.mxu0 0.0
    %542 = vmatprep.subr.mxu0 0.0
    %543 = vmatpush2.msra.mxu0 0.0
    %544 = vmatprep.subr.mxu0 0.0
    %545 = vmatpush2.msra.mxu0 0.0
    %546 = vmatprep.subr.mxu0 0.0
    %547 = vmatpush2.msra.mxu0 0.0
    %548 = vmatprep.subr.mxu0 0.0
    %549 = vmatpush2.msra.mxu0 0.0
    %550 = vmatprep.subr.mxu0 0.0
    %551 = vmatpush2.msra.mxu0 0.0
    %552 = vmatprep.subr.mxu0 0.0
    %553 = vmatpush2.msra.mxu0 0.0
    %554 = vmatprep.subr.mxu0 0.0
    %555 = vmatpush2.msra.mxu0 0.0
    %556 = vmatprep.subr.mxu0 0.0
    %557 = vmatpush2.msra.mxu0 0.0
    %558 = vmatprep.subr.mxu0 0.0
    %559 = vmatpush2.msra.mxu0 0.0
    %560 = vmatprep.subr.mxu0 0.0
    %561 = vmatpush2.msra.mxu0 0.0
    %562 = vmatprep.subr.mxu0 0.0
    %563 = vmatpush2.msra.mxu0 0.0
    %564 = vmatprep.subr.mxu0 0.0
    %565 = vmatpush2.msra.mxu0 0.0
    %566 = vmatprep.subr.mxu0 0.0
    %567 = vmatpush2.msra.mxu0 0.0
    %568 = vmatprep.mubr.f32.mxu0 0.0
    %569 = vmatmul.mubr.f32.gmra.mxu0 %v419
    %v570 = vpop.f32.mrf.mxu0
    %v571 = vadd.f32 0.0, %v570
    %v572 = vpop.f32.mrf.mxu0
    %v573 = vadd.f32 0.0, %v572
    %574 = vdwg.mxu0
    %v576 = vsel %vm45, %v398, 0
    %v579 = vsel %vm52, %v394, 0
    %v582 = vsel %vm52, %v395, 0
    %v585 = vsel %vm52, %v396, 0
    %v588 = vsel %vm52, %v397, 0
    %590 = vmatprep.subr.mxu0 0.0
    %591 = vmatpush1.msra.mxu0 0.0
    %592 = vmatprep.subr.mxu0 0.0
    %593 = vmatpush1.msra.mxu0 0.0
    %594 = vmatprep.subr.mxu0 0.0
    %595 = vmatpush1.msra.mxu0 0.0
    %596 = vmatprep.subr.mxu0 0.0
    %597 = vmatpush1.msra.mxu0 0.0
    %598 = vmatprep.subr.mxu0 0.0
    %599 = vmatpush1.msra.mxu0 0.0
    %600 = vmatprep.subr.mxu0 0.0
    %601 = vmatpush1.msra.mxu0 0.0
    %602 = vmatprep.subr.mxu0 0.0
    %603 = vmatpush1.msra.mxu0 0.0
    %604 = vmatprep.subr.mxu0 0.0
    %605 = vmatpush1.msra.mxu0 0.0
    %606 = vmatprep.subr.mxu0 0.0
    %607 = vmatpush1.msra.mxu0 0.0
    %608 = vmatprep.subr.mxu0 0.0
    %609 = vmatpush1.msra.mxu0 0.0
    %610 = vmatprep.subr.mxu0 0.0
    %611 = vmatpush1.msra.mxu0 0.0
    %612 = vmatprep.subr.mxu0 0.0
    %613 = vmatpush1.msra.mxu0 0.0
    %614 = vmatprep.subr.mxu0 0.0
    %615 = vmatpush1.msra.mxu0 0.0
    %616 = vmatprep.subr.mxu0 0.0
    %617 = vmatpush1.msra.mxu0 0.0
    %618 = vmatprep.subr.mxu0 0.0
    %619 = vmatpush1.msra.mxu0 0.0
    %620 = vmatprep.subr.mxu0 %v582
    %621 = vmatpush1.msra.mxu0 %v579
    %622 = vmatprep.subr.mxu0 0.0
    %623 = vmatpush2.msra.mxu0 0.0
    %624 = vmatprep.subr.mxu0 0.0
    %625 = vmatpush2.msra.mxu0 0.0
    %626 = vmatprep.subr.mxu0 0.0
    %627 = vmatpush2.msra.mxu0 0.0
    %628 = vmatprep.subr.mxu0 0.0
    %629 = vmatpush2.msra.mxu0 0.0
    %630 = vmatprep.subr.mxu0 0.0
    %631 = vmatpush2.msra.mxu0 0.0
    %632 = vmatprep.subr.mxu0 0.0
    %633 = vmatpush2.msra.mxu0 0.0
    %634 = vmatprep.subr.mxu0 0.0
    %635 = vmatpush2.msra.mxu0 0.0
    %636 = vmatprep.subr.mxu0 0.0
    %637 = vmatpush2.msra.mxu0 0.0
    %638 = vmatprep.subr.mxu0 0.0
    %639 = vmatpush2.msra.mxu0 0.0
    %640 = vmatprep.subr.mxu0 0.0
    %641 = vmatpush2.msra.mxu0 0.0
    %642 = vmatprep.subr.mxu0 0.0
    %643 = vmatpush2.msra.mxu0 0.0
    %644 = vmatprep.subr.mxu0 0.0
    %645 = vmatpush2.msra.mxu0 0.0
    %646 = vmatprep.subr.mxu0 0.0
    %647 = vmatpush2.msra.mxu0 0.0
    %648 = vmatprep.subr.mxu0 0.0
    %649 = vmatpush2.msra.mxu0 0.0
    %650 = vmatprep.subr.mxu0 0.0
    %651 = vmatpush2.msra.mxu0 0.0
    %652 = vmatprep.subr.mxu0 0.0
    %653 = vmatpush2.msra.mxu0 0.0
    %654 = vmatprep.mubr.f32.mxu0 0.0
    %655 = vmatmul.mubr.f32.gmra.mxu0 %v576
    %v656 = vpop.f32.mrf.mxu0
    %v657 = vadd.f32 %v500, %v656
    %v658 = vpop.f32.mrf.mxu0
    %v659 = vadd.f32 %v502, %v658
    %660 = vdwg.mxu0
    %661 = vmatprep.subr.mxu0 0.0
    %662 = vmatpush1.msra.mxu0 0.0
    %663 = vmatprep.subr.mxu0 0.0
    %664 = vmatpush1.msra.mxu0 0.0
    %665 = vmatprep.subr.mxu0 0.0
    %666 = vmatpush1.msra.mxu0 0.0
    %667 = vmatprep.subr.mxu0 0.0
    %668 = vmatpush1.msra.mxu0 0.0
    %669 = vmatprep.subr.mxu0 0.0
    %670 = vmatpush1.msra.mxu0 0.0
    %671 = vmatprep.subr.mxu0 0.0
    %672 = vmatpush1.msra.mxu0 0.0
    %673 = vmatprep.subr.mxu0 0.0
    %674 = vmatpush1.msra.mxu0 0.0
    %675 = vmatprep.subr.mxu0 0.0
    %676 = vmatpush1.msra.mxu0 0.0
    %677 = vmatprep.subr.mxu0 0.0
    %678 = vmatpush1.msra.mxu0 0.0
    %679 = vmatprep.subr.mxu0 0.0
    %680 = vmatpush1.msra.mxu0 0.0
    %681 = vmatprep.subr.mxu0 0.0
    %682 = vmatpush1.msra.mxu0 0.0
    %683 = vmatprep.subr.mxu0 0.0
    %684 = vmatpush1.msra.mxu0 0.0
    %685 = vmatprep.subr.mxu0 0.0
    %686 = vmatpush1.msra.mxu0 0.0
    %687 = vmatprep.subr.mxu0 0.0
    %688 = vmatpush1.msra.mxu0 0.0
    %689 = vmatprep.subr.mxu0 0.0
    %690 = vmatpush1.msra.mxu0 0.0
    %691 = vmatprep.subr.mxu0 %v588
    %692 = vmatpush1.msra.mxu0 %v585
    %693 = vmatprep.subr.mxu0 0.0
    %694 = vmatpush2.msra.mxu0 0.0
    %695 = vmatprep.subr.mxu0 0.0
    %696 = vmatpush2.msra.mxu0 0.0
    %697 = vmatprep.subr.mxu0 0.0
    %698 = vmatpush2.msra.mxu0 0.0
    %699 = vmatprep.subr.mxu0 0.0
    %700 = vmatpush2.msra.mxu0 0.0
    %701 = vmatprep.subr.mxu0 0.0
    %702 = vmatpush2.msra.mxu0 0.0
    %703 = vmatprep.subr.mxu0 0.0
    %704 = vmatpush2.msra.mxu0 0.0
    %705 = vmatprep.subr.mxu0 0.0
    %706 = vmatpush2.msra.mxu0 0.0
    %707 = vmatprep.subr.mxu0 0.0
    %708 = vmatpush2.msra.mxu0 0.0
    %709 = vmatprep.subr.mxu0 0.0
    %710 = vmatpush2.msra.mxu0 0.0
    %711 = vmatprep.subr.mxu0 0.0
    %712 = vmatpush2.msra.mxu0 0.0
    %713 = vmatprep.subr.mxu0 0.0
    %714 = vmatpush2.msra.mxu0 0.0
    %715 = vmatprep.subr.mxu0 0.0
    %716 = vmatpush2.msra.mxu0 0.0
    %717 = vmatprep.subr.mxu0 0.0
    %718 = vmatpush2.msra.mxu0 0.0
    %719 = vmatprep.subr.mxu0 0.0
    %720 = vmatpush2.msra.mxu0 0.0
    %721 = vmatprep.subr.mxu0 0.0
    %722 = vmatpush2.msra.mxu0 0.0
    %723 = vmatprep.subr.mxu0 0.0
    %724 = vmatpush2.msra.mxu0 0.0
    %725 = vmatprep.mubr.f32.mxu0 0.0
    %726 = vmatmul.mubr.f32.gmra.mxu0 %v576
    %v727 = vpop.f32.mrf.mxu0
    %v728 = vadd.f32 %v571, %v727
    %v729 = vpop.f32.mrf.mxu0
    %v730 = vadd.f32 %v573, %v729
    %731 = vdwg.mxu0
    %732 = vrot.lane.b32.xlu0 %v224, 15
    %v733 = vpop.permute.xlu0 %732
    %734 = vrot.lane.b32.xlu0 %v225, 15
    %v735 = vpop.permute.xlu0 %734
    %736 = vrot.lane.b32.xlu0 %v226, 15
    %v737 = vpop.permute.xlu0 %736
    %738 = vrot.lane.b32.xlu0 %v227, 15
    %v739 = vpop.permute.xlu0 %738
    %vm740 = vcmp.lt.s32.totalorder %v229, 15
    %v741 = vsel %vm740, %v737, %v739
    %v742 = vsel %vm740, %v735, %v737
    %v743 = vsel %vm740, %v733, %v735
    %v744 = vsel %vm740, %v739, %v733
    %v745 = vmul.f32 %v361, %v349
    %v746 = vmul.f32 %v362, %v350
    %v747 = vmul.f32 %v363, %v351
    %v748 = vmul.f32 %v364, %v352
    %v749 = vmul.f32 %v744, %v745
    %v750 = vmul.f32 %v743, %v746
    %v751 = vmul.f32 %v742, %v747
    %v752 = vmul.f32 %v741, %v748
    %s753 = scalar_lea.vmem %s3, 8
    %v754 = vld [vmem:[%s753] sm:$0xf]
    %v756 = vsel %vm45, %v754, 0
    %v759 = vsel %vm52, %v749, 0
    %v762 = vsel %vm52, %v750, 0
    %v765 = vsel %vm52, %v751, 0
    %v768 = vsel %vm52, %v752, 0
    %770 = vmatprep.subr.mxu0 0.0
    %771 = vmatpush1.msra.mxu0 0.0
    %772 = vmatprep.subr.mxu0 0.0
    %773 = vmatpush1.msra.mxu0 0.0
    %774 = vmatprep.subr.mxu0 0.0
    %775 = vmatpush1.msra.mxu0 0.0
    %776 = vmatprep.subr.mxu0 0.0
    %777 = vmatpush1.msra.mxu0 0.0
    %778 = vmatprep.subr.mxu0 0.0
    %779 = vmatpush1.msra.mxu0 0.0
    %780 = vmatprep.subr.mxu0 0.0
    %781 = vmatpush1.msra.mxu0 0.0
    %782 = vmatprep.subr.mxu0 0.0
    %783 = vmatpush1.msra.mxu0 0.0
    %784 = vmatprep.subr.mxu0 0.0
    %785 = vmatpush1.msra.mxu0 0.0
    %786 = vmatprep.subr.mxu0 0.0
    %787 = vmatpush1.msra.mxu0 0.0
    %788 = vmatprep.subr.mxu0 0.0
    %789 = vmatpush1.msra.mxu0 0.0
    %790 = vmatprep.subr.mxu0 0.0
    %791 = vmatpush1.msra.mxu0 0.0
    %792 = vmatprep.subr.mxu0 0.0
    %793 = vmatpush1.msra.mxu0 0.0
    %794 = vmatprep.subr.mxu0 0.0
    %795 = vmatpush1.msra.mxu0 0.0
    %796 = vmatprep.subr.mxu0 0.0
    %797 = vmatpush1.msra.mxu0 0.0
    %798 = vmatprep.subr.mxu0 0.0
    %799 = vmatpush1.msra.mxu0 0.0
    %800 = vmatprep.subr.mxu0 %v762
    %801 = vmatpush1.msra.mxu0 %v759
    %802 = vmatprep.subr.mxu0 0.0
    %803 = vmatpush2.msra.mxu0 0.0
    %804 = vmatprep.subr.mxu0 0.0
    %805 = vmatpush2.msra.mxu0 0.0
    %806 = vmatprep.subr.mxu0 0.0
    %807 = vmatpush2.msra.mxu0 0.0
    %808 = vmatprep.subr.mxu0 0.0
    %809 = vmatpush2.msra.mxu0 0.0
    %810 = vmatprep.subr.mxu0 0.0
    %811 = vmatpush2.msra.mxu0 0.0
    %812 = vmatprep.subr.mxu0 0.0
    %813 = vmatpush2.msra.mxu0 0.0
    %814 = vmatprep.subr.mxu0 0.0
    %815 = vmatpush2.msra.mxu0 0.0
    %816 = vmatprep.subr.mxu0 0.0
    %817 = vmatpush2.msra.mxu0 0.0
    %818 = vmatprep.subr.mxu0 0.0
    %819 = vmatpush2.msra.mxu0 0.0
    %820 = vmatprep.subr.mxu0 0.0
    %821 = vmatpush2.msra.mxu0 0.0
    %822 = vmatprep.subr.mxu0 0.0
    %823 = vmatpush2.msra.mxu0 0.0
    %824 = vmatprep.subr.mxu0 0.0
    %825 = vmatpush2.msra.mxu0 0.0
    %826 = vmatprep.subr.mxu0 0.0
    %827 = vmatpush2.msra.mxu0 0.0
    %828 = vmatprep.subr.mxu0 0.0
    %829 = vmatpush2.msra.mxu0 0.0
    %830 = vmatprep.subr.mxu0 0.0
    %831 = vmatpush2.msra.mxu0 0.0
    %832 = vmatprep.subr.mxu0 0.0
    %833 = vmatpush2.msra.mxu0 0.0
    %834 = vmatprep.mubr.f32.mxu0 0.0
    %835 = vmatmul.mubr.f32.gmra.mxu0 %v756
    %v836 = vpop.f32.mrf.mxu0
    %v837 = vadd.f32 0.0, %v836
    %v838 = vpop.f32.mrf.mxu0
    %v839 = vadd.f32 0.0, %v838
    %840 = vdwg.mxu0
    %841 = vmatprep.subr.mxu0 0.0
    %842 = vmatpush1.msra.mxu0 0.0
    %843 = vmatprep.subr.mxu0 0.0
    %844 = vmatpush1.msra.mxu0 0.0
    %845 = vmatprep.subr.mxu0 0.0
    %846 = vmatpush1.msra.mxu0 0.0
    %847 = vmatprep.subr.mxu0 0.0
    %848 = vmatpush1.msra.mxu0 0.0
    %849 = vmatprep.subr.mxu0 0.0
    %850 = vmatpush1.msra.mxu0 0.0
    %851 = vmatprep.subr.mxu0 0.0
    %852 = vmatpush1.msra.mxu0 0.0
    %853 = vmatprep.subr.mxu0 0.0
    %854 = vmatpush1.msra.mxu0 0.0
    %855 = vmatprep.subr.mxu0 0.0
    %856 = vmatpush1.msra.mxu0 0.0
    %857 = vmatprep.subr.mxu0 0.0
    %858 = vmatpush1.msra.mxu0 0.0
    %859 = vmatprep.subr.mxu0 0.0
    %860 = vmatpush1.msra.mxu0 0.0
    %861 = vmatprep.subr.mxu0 0.0
    %862 = vmatpush1.msra.mxu0 0.0
    %863 = vmatprep.subr.mxu0 0.0
    %864 = vmatpush1.msra.mxu0 0.0
    %865 = vmatprep.subr.mxu0 0.0
    %866 = vmatpush1.msra.mxu0 0.0
    %867 = vmatprep.subr.mxu0 0.0
    %868 = vmatpush1.msra.mxu0 0.0
    %869 = vmatprep.subr.mxu0 0.0
    %870 = vmatpush1.msra.mxu0 0.0
    %871 = vmatprep.subr.mxu0 %v768
    %872 = vmatpush1.msra.mxu0 %v765
    %873 = vmatprep.subr.mxu0 0.0
    %874 = vmatpush2.msra.mxu0 0.0
    %875 = vmatprep.subr.mxu0 0.0
    %876 = vmatpush2.msra.mxu0 0.0
    %877 = vmatprep.subr.mxu0 0.0
    %878 = vmatpush2.msra.mxu0 0.0
    %879 = vmatprep.subr.mxu0 0.0
    %880 = vmatpush2.msra.mxu0 0.0
    %881 = vmatprep.subr.mxu0 0.0
    %882 = vmatpush2.msra.mxu0 0.0
    %883 = vmatprep.subr.mxu0 0.0
    %884 = vmatpush2.msra.mxu0 0.0
    %885 = vmatprep.subr.mxu0 0.0
    %886 = vmatpush2.msra.mxu0 0.0
    %887 = vmatprep.subr.mxu0 0.0
    %888 = vmatpush2.msra.mxu0 0.0
    %889 = vmatprep.subr.mxu0 0.0
    %890 = vmatpush2.msra.mxu0 0.0
    %891 = vmatprep.subr.mxu0 0.0
    %892 = vmatpush2.msra.mxu0 0.0
    %893 = vmatprep.subr.mxu0 0.0
    %894 = vmatpush2.msra.mxu0 0.0
    %895 = vmatprep.subr.mxu0 0.0
    %896 = vmatpush2.msra.mxu0 0.0
    %897 = vmatprep.subr.mxu0 0.0
    %898 = vmatpush2.msra.mxu0 0.0
    %899 = vmatprep.subr.mxu0 0.0
    %900 = vmatpush2.msra.mxu0 0.0
    %901 = vmatprep.subr.mxu0 0.0
    %902 = vmatpush2.msra.mxu0 0.0
    %903 = vmatprep.subr.mxu0 0.0
    %904 = vmatpush2.msra.mxu0 0.0
    %905 = vmatprep.mubr.f32.mxu0 0.0
    %906 = vmatmul.mubr.f32.gmra.mxu0 %v756
    %v907 = vpop.f32.mrf.mxu0
    %v908 = vadd.f32 0.0, %v907
    %v909 = vpop.f32.mrf.mxu0
    %v910 = vadd.f32 0.0, %v909
    %911 = vdwg.mxu0
    %v912 = vadd.f32 %v657, %v837
    %v913 = vadd.f32 %v659, %v839
    %v914 = vadd.f32 %v728, %v908
    %v915 = vadd.f32 %v730, %v910
    %916 = vrot.lane.b32.xlu0 %v224, 1
    %v917 = vpop.permute.xlu0 %916
    %918 = vrot.lane.b32.xlu0 %v225, 1
    %v919 = vpop.permute.xlu0 %918
    %920 = vrot.lane.b32.xlu0 %v226, 1
    %v921 = vpop.permute.xlu0 %920
    %922 = vrot.lane.b32.xlu0 %v227, 1
    %v923 = vpop.permute.xlu0 %922
    %vm924 = vcmp.lt.s32.totalorder %v229, 1
    %v925 = vsel %vm924, %v921, %v923
    %v926 = vsel %vm924, %v919, %v921
    %v927 = vsel %vm924, %v917, %v919
    %v928 = vsel %vm924, %v923, %v917
    %v929 = vmul.f32 %v928, %v337
    %v930 = vmul.f32 %v927, %v338
    %v931 = vmul.f32 %v926, %v339
    %v932 = vmul.f32 %v925, %v340
    %s933 = scalar_lea.vmem %s3, 12
    %v934 = vld [vmem:[%s933] sm:$0xf]
    %v936 = vsel %vm45, %v934, 0
    %v939 = vsel %vm52, %v929, 0
    %v942 = vsel %vm52, %v930, 0
    %v945 = vsel %vm52, %v931, 0
    %v948 = vsel %vm52, %v932, 0
    %950 = vmatprep.subr.mxu0 0.0
    %951 = vmatpush1.msra.mxu0 0.0
    %952 = vmatprep.subr.mxu0 0.0
    %953 = vmatpush1.msra.mxu0 0.0
    %954 = vmatprep.subr.mxu0 0.0
    %955 = vmatpush1.msra.mxu0 0.0
    %956 = vmatprep.subr.mxu0 0.0
    %957 = vmatpush1.msra.mxu0 0.0
    %958 = vmatprep.subr.mxu0 0.0
    %959 = vmatpush1.msra.mxu0 0.0
    %960 = vmatprep.subr.mxu0 0.0
    %961 = vmatpush1.msra.mxu0 0.0
    %962 = vmatprep.subr.mxu0 0.0
    %963 = vmatpush1.msra.mxu0 0.0
    %964 = vmatprep.subr.mxu0 0.0
    %965 = vmatpush1.msra.mxu0 0.0
    %966 = vmatprep.subr.mxu0 0.0
    %967 = vmatpush1.msra.mxu0 0.0
    %968 = vmatprep.subr.mxu0 0.0
    %969 = vmatpush1.msra.mxu0 0.0
    %970 = vmatprep.subr.mxu0 0.0
    %971 = vmatpush1.msra.mxu0 0.0
    %972 = vmatprep.subr.mxu0 0.0
    %973 = vmatpush1.msra.mxu0 0.0
    %974 = vmatprep.subr.mxu0 0.0
    %975 = vmatpush1.msra.mxu0 0.0
    %976 = vmatprep.subr.mxu0 0.0
    %977 = vmatpush1.msra.mxu0 0.0
    %978 = vmatprep.subr.mxu0 0.0
    %979 = vmatpush1.msra.mxu0 0.0
    %980 = vmatprep.subr.mxu0 %v942
    %981 = vmatpush1.msra.mxu0 %v939
    %982 = vmatprep.subr.mxu0 0.0
    %983 = vmatpush2.msra.mxu0 0.0
    %984 = vmatprep.subr.mxu0 0.0
    %985 = vmatpush2.msra.mxu0 0.0
    %986 = vmatprep.subr.mxu0 0.0
    %987 = vmatpush2.msra.mxu0 0.0
    %988 = vmatprep.subr.mxu0 0.0
    %989 = vmatpush2.msra.mxu0 0.0
    %990 = vmatprep.subr.mxu0 0.0
    %991 = vmatpush2.msra.mxu0 0.0
    %992 = vmatprep.subr.mxu0 0.0
    %993 = vmatpush2.msra.mxu0 0.0
    %994 = vmatprep.subr.mxu0 0.0
    %995 = vmatpush2.msra.mxu0 0.0
    %996 = vmatprep.subr.mxu0 0.0
    %997 = vmatpush2.msra.mxu0 0.0
    %998 = vmatprep.subr.mxu0 0.0
    %999 = vmatpush2.msra.mxu0 0.0
    %1000 = vmatprep.subr.mxu0 0.0
    %1001 = vmatpush2.msra.mxu0 0.0
    %1002 = vmatprep.subr.mxu0 0.0
    %1003 = vmatpush2.msra.mxu0 0.0
    %1004 = vmatprep.subr.mxu0 0.0
    %1005 = vmatpush2.msra.mxu0 0.0
    %1006 = vmatprep.subr.mxu0 0.0
    %1007 = vmatpush2.msra.mxu0 0.0
    %1008 = vmatprep.subr.mxu0 0.0
    %1009 = vmatpush2.msra.mxu0 0.0
    %1010 = vmatprep.subr.mxu0 0.0
    %1011 = vmatpush2.msra.mxu0 0.0
    %1012 = vmatprep.subr.mxu0 0.0
    %1013 = vmatpush2.msra.mxu0 0.0
    %1014 = vmatprep.mubr.f32.mxu0 0.0
    %1015 = vmatmul.mubr.f32.gmra.mxu0 %v936
    %v1016 = vpop.f32.mrf.mxu0
    %v1017 = vadd.f32 0.0, %v1016
    %v1018 = vpop.f32.mrf.mxu0
    %v1019 = vadd.f32 0.0, %v1018
    %1020 = vdwg.mxu0
    %1021 = vmatprep.subr.mxu0 0.0
    %1022 = vmatpush1.msra.mxu0 0.0
    %1023 = vmatprep.subr.mxu0 0.0
    %1024 = vmatpush1.msra.mxu0 0.0
    %1025 = vmatprep.subr.mxu0 0.0
    %1026 = vmatpush1.msra.mxu0 0.0
    %1027 = vmatprep.subr.mxu0 0.0
    %1028 = vmatpush1.msra.mxu0 0.0
    %1029 = vmatprep.subr.mxu0 0.0
    %1030 = vmatpush1.msra.mxu0 0.0
    %1031 = vmatprep.subr.mxu0 0.0
    %1032 = vmatpush1.msra.mxu0 0.0
    %1033 = vmatprep.subr.mxu0 0.0
    %1034 = vmatpush1.msra.mxu0 0.0
    %1035 = vmatprep.subr.mxu0 0.0
    %1036 = vmatpush1.msra.mxu0 0.0
    %1037 = vmatprep.subr.mxu0 0.0
    %1038 = vmatpush1.msra.mxu0 0.0
    %1039 = vmatprep.subr.mxu0 0.0
    %1040 = vmatpush1.msra.mxu0 0.0
    %1041 = vmatprep.subr.mxu0 0.0
    %1042 = vmatpush1.msra.mxu0 0.0
    %1043 = vmatprep.subr.mxu0 0.0
    %1044 = vmatpush1.msra.mxu0 0.0
    %1045 = vmatprep.subr.mxu0 0.0
    %1046 = vmatpush1.msra.mxu0 0.0
    %1047 = vmatprep.subr.mxu0 0.0
    %1048 = vmatpush1.msra.mxu0 0.0
    %1049 = vmatprep.subr.mxu0 0.0
    %1050 = vmatpush1.msra.mxu0 0.0
    %1051 = vmatprep.subr.mxu0 %v948
    %1052 = vmatpush1.msra.mxu0 %v945
    %1053 = vmatprep.subr.mxu0 0.0
    %1054 = vmatpush2.msra.mxu0 0.0
    %1055 = vmatprep.subr.mxu0 0.0
    %1056 = vmatpush2.msra.mxu0 0.0
    %1057 = vmatprep.subr.mxu0 0.0
    %1058 = vmatpush2.msra.mxu0 0.0
    %1059 = vmatprep.subr.mxu0 0.0
    %1060 = vmatpush2.msra.mxu0 0.0
    %1061 = vmatprep.subr.mxu0 0.0
    %1062 = vmatpush2.msra.mxu0 0.0
    %1063 = vmatprep.subr.mxu0 0.0
    %1064 = vmatpush2.msra.mxu0 0.0
    %1065 = vmatprep.subr.mxu0 0.0
    %1066 = vmatpush2.msra.mxu0 0.0
    %1067 = vmatprep.subr.mxu0 0.0
    %1068 = vmatpush2.msra.mxu0 0.0
    %1069 = vmatprep.subr.mxu0 0.0
    %1070 = vmatpush2.msra.mxu0 0.0
    %1071 = vmatprep.subr.mxu0 0.0
    %1072 = vmatpush2.msra.mxu0 0.0
    %1073 = vmatprep.subr.mxu0 0.0
    %1074 = vmatpush2.msra.mxu0 0.0
    %1075 = vmatprep.subr.mxu0 0.0
    %1076 = vmatpush2.msra.mxu0 0.0
    %1077 = vmatprep.subr.mxu0 0.0
    %1078 = vmatpush2.msra.mxu0 0.0
    %1079 = vmatprep.subr.mxu0 0.0
    %1080 = vmatpush2.msra.mxu0 0.0
    %1081 = vmatprep.subr.mxu0 0.0
    %1082 = vmatpush2.msra.mxu0 0.0
    %1083 = vmatprep.subr.mxu0 0.0
    %1084 = vmatpush2.msra.mxu0 0.0
    %1085 = vmatprep.mubr.f32.mxu0 0.0
    %1086 = vmatmul.mubr.f32.gmra.mxu0 %v936
    %v1087 = vpop.f32.mrf.mxu0
    %v1088 = vadd.f32 0.0, %v1087
    %v1089 = vpop.f32.mrf.mxu0
    %v1090 = vadd.f32 0.0, %v1089
    %1091 = vdwg.mxu0
    %v1092 = vadd.f32 %v912, %v1017
    %v1093 = vadd.f32 %v913, %v1019
    %v1094 = vadd.f32 %v914, %v1088
    %v1095 = vadd.f32 %v915, %v1090
    %s1096 = scalar_lea.vmem %s3, 16
    %v1097 = vld [vmem:[%s1096] sm:$0xf]
    %v1099 = vsel %vm45, %v1097, 0
    %v1102 = vsel %vm52, %v224, 0
    %v1105 = vsel %vm52, %v225, 0
    %v1108 = vsel %vm52, %v226, 0
    %v1111 = vsel %vm52, %v227, 0
    %1113 = vmatprep.subr.mxu0 0.0
    %1114 = vmatpush1.msra.mxu0 0.0
    %1115 = vmatprep.subr.mxu0 0.0
    %1116 = vmatpush1.msra.mxu0 0.0
    %1117 = vmatprep.subr.mxu0 0.0
    %1118 = vmatpush1.msra.mxu0 0.0
    %1119 = vmatprep.subr.mxu0 0.0
    %1120 = vmatpush1.msra.mxu0 0.0
    %1121 = vmatprep.subr.mxu0 0.0
    %1122 = vmatpush1.msra.mxu0 0.0
    %1123 = vmatprep.subr.mxu0 0.0
    %1124 = vmatpush1.msra.mxu0 0.0
    %1125 = vmatprep.subr.mxu0 0.0
    %1126 = vmatpush1.msra.mxu0 0.0
    %1127 = vmatprep.subr.mxu0 0.0
    %1128 = vmatpush1.msra.mxu0 0.0
    %1129 = vmatprep.subr.mxu0 0.0
    %1130 = vmatpush1.msra.mxu0 0.0
    %1131 = vmatprep.subr.mxu0 0.0
    %1132 = vmatpush1.msra.mxu0 0.0
    %1133 = vmatprep.subr.mxu0 0.0
    %1134 = vmatpush1.msra.mxu0 0.0
    %1135 = vmatprep.subr.mxu0 0.0
    %1136 = vmatpush1.msra.mxu0 0.0
    %1137 = vmatprep.subr.mxu0 0.0
    %1138 = vmatpush1.msra.mxu0 0.0
    %1139 = vmatprep.subr.mxu0 0.0
    %1140 = vmatpush1.msra.mxu0 0.0
    %1141 = vmatprep.subr.mxu0 0.0
    %1142 = vmatpush1.msra.mxu0 0.0
    %1143 = vmatprep.subr.mxu0 %v1105
    %1144 = vmatpush1.msra.mxu0 %v1102
    %1145 = vmatprep.subr.mxu0 0.0
    %1146 = vmatpush2.msra.mxu0 0.0
    %1147 = vmatprep.subr.mxu0 0.0
    %1148 = vmatpush2.msra.mxu0 0.0
    %1149 = vmatprep.subr.mxu0 0.0
    %1150 = vmatpush2.msra.mxu0 0.0
    %1151 = vmatprep.subr.mxu0 0.0
    %1152 = vmatpush2.msra.mxu0 0.0
    %1153 = vmatprep.subr.mxu0 0.0
    %1154 = vmatpush2.msra.mxu0 0.0
    %1155 = vmatprep.subr.mxu0 0.0
    %1156 = vmatpush2.msra.mxu0 0.0
    %1157 = vmatprep.subr.mxu0 0.0
    %1158 = vmatpush2.msra.mxu0 0.0
    %1159 = vmatprep.subr.mxu0 0.0
    %1160 = vmatpush2.msra.mxu0 0.0
    %1161 = vmatprep.subr.mxu0 0.0
    %1162 = vmatpush2.msra.mxu0 0.0
    %1163 = vmatprep.subr.mxu0 0.0
    %1164 = vmatpush2.msra.mxu0 0.0
    %1165 = vmatprep.subr.mxu0 0.0
    %1166 = vmatpush2.msra.mxu0 0.0
    %1167 = vmatprep.subr.mxu0 0.0
    %1168 = vmatpush2.msra.mxu0 0.0
    %1169 = vmatprep.subr.mxu0 0.0
    %1170 = vmatpush2.msra.mxu0 0.0
    %1171 = vmatprep.subr.mxu0 0.0
    %1172 = vmatpush2.msra.mxu0 0.0
    %1173 = vmatprep.subr.mxu0 0.0
    %1174 = vmatpush2.msra.mxu0 0.0
    %1175 = vmatprep.subr.mxu0 0.0
    %1176 = vmatpush2.msra.mxu0 0.0
    %1177 = vmatprep.mubr.f32.mxu0 0.0
    %1178 = vmatmul.mubr.f32.gmra.mxu0 %v1099
    %v1179 = vpop.f32.mrf.mxu0
    %v1180 = vadd.f32 0.0, %v1179
    %v1181 = vpop.f32.mrf.mxu0
    %v1182 = vadd.f32 0.0, %v1181
    %1183 = vdwg.mxu0
    %1184 = vmatprep.subr.mxu0 0.0
    %1185 = vmatpush1.msra.mxu0 0.0
    %1186 = vmatprep.subr.mxu0 0.0
    %1187 = vmatpush1.msra.mxu0 0.0
    %1188 = vmatprep.subr.mxu0 0.0
    %1189 = vmatpush1.msra.mxu0 0.0
    %1190 = vmatprep.subr.mxu0 0.0
    %1191 = vmatpush1.msra.mxu0 0.0
    %1192 = vmatprep.subr.mxu0 0.0
    %1193 = vmatpush1.msra.mxu0 0.0
    %1194 = vmatprep.subr.mxu0 0.0
    %1195 = vmatpush1.msra.mxu0 0.0
    %1196 = vmatprep.subr.mxu0 0.0
    %1197 = vmatpush1.msra.mxu0 0.0
    %1198 = vmatprep.subr.mxu0 0.0
    %1199 = vmatpush1.msra.mxu0 0.0
    %1200 = vmatprep.subr.mxu0 0.0
    %1201 = vmatpush1.msra.mxu0 0.0
    %1202 = vmatprep.subr.mxu0 0.0
    %1203 = vmatpush1.msra.mxu0 0.0
    %1204 = vmatprep.subr.mxu0 0.0
    %1205 = vmatpush1.msra.mxu0 0.0
    %1206 = vmatprep.subr.mxu0 0.0
    %1207 = vmatpush1.msra.mxu0 0.0
    %1208 = vmatprep.subr.mxu0 0.0
    %1209 = vmatpush1.msra.mxu0 0.0
    %1210 = vmatprep.subr.mxu0 0.0
    %1211 = vmatpush1.msra.mxu0 0.0
    %1212 = vmatprep.subr.mxu0 0.0
    %1213 = vmatpush1.msra.mxu0 0.0
    %1214 = vmatprep.subr.mxu0 %v1111
    %1215 = vmatpush1.msra.mxu0 %v1108
    %1216 = vmatprep.subr.mxu0 0.0
    %1217 = vmatpush2.msra.mxu0 0.0
    %1218 = vmatprep.subr.mxu0 0.0
    %1219 = vmatpush2.msra.mxu0 0.0
    %1220 = vmatprep.subr.mxu0 0.0
    %1221 = vmatpush2.msra.mxu0 0.0
    %1222 = vmatprep.subr.mxu0 0.0
    %1223 = vmatpush2.msra.mxu0 0.0
    %1224 = vmatprep.subr.mxu0 0.0
    %1225 = vmatpush2.msra.mxu0 0.0
    %1226 = vmatprep.subr.mxu0 0.0
    %1227 = vmatpush2.msra.mxu0 0.0
    %1228 = vmatprep.subr.mxu0 0.0
    %1229 = vmatpush2.msra.mxu0 0.0
    %1230 = vmatprep.subr.mxu0 0.0
    %1231 = vmatpush2.msra.mxu0 0.0
    %1232 = vmatprep.subr.mxu0 0.0
    %1233 = vmatpush2.msra.mxu0 0.0
    %1234 = vmatprep.subr.mxu0 0.0
    %1235 = vmatpush2.msra.mxu0 0.0
    %1236 = vmatprep.subr.mxu0 0.0
    %1237 = vmatpush2.msra.mxu0 0.0
    %1238 = vmatprep.subr.mxu0 0.0
    %1239 = vmatpush2.msra.mxu0 0.0
    %1240 = vmatprep.subr.mxu0 0.0
    %1241 = vmatpush2.msra.mxu0 0.0
    %1242 = vmatprep.subr.mxu0 0.0
    %1243 = vmatpush2.msra.mxu0 0.0
    %1244 = vmatprep.subr.mxu0 0.0
    %1245 = vmatpush2.msra.mxu0 0.0
    %1246 = vmatprep.subr.mxu0 0.0
    %1247 = vmatpush2.msra.mxu0 0.0
    %1248 = vmatprep.mubr.f32.mxu0 0.0
    %1249 = vmatmul.mubr.f32.gmra.mxu0 %v1099
    %v1250 = vpop.f32.mrf.mxu0
    %v1251 = vadd.f32 0.0, %v1250
    %v1252 = vpop.f32.mrf.mxu0
    %v1253 = vadd.f32 0.0, %v1252
    %1254 = vdwg.mxu0
    %v1255 = vadd.f32 %v1092, %v1180
    %v1256 = vadd.f32 %v1093, %v1182
    %v1257 = vadd.f32 %v1094, %v1251
    %v1258 = vadd.f32 %v1095, %v1253
    %1259 = vrot.lane.b32.xlu0 %v224, 127
    %v1260 = vpop.permute.xlu0 %1259
    %1261 = vrot.lane.b32.xlu0 %v225, 127
    %v1262 = vpop.permute.xlu0 %1261
    %1263 = vrot.lane.b32.xlu0 %v226, 127
    %v1264 = vpop.permute.xlu0 %1263
    %1265 = vrot.lane.b32.xlu0 %v227, 127
    %v1266 = vpop.permute.xlu0 %1265
    %vm1267 = vcmp.lt.s32.totalorder %v229, 127
    %v1268 = vsel %vm1267, %v1264, %v1266
    %v1269 = vsel %vm1267, %v1262, %v1264
    %v1270 = vsel %vm1267, %v1260, %v1262
    %v1271 = vsel %vm1267, %v1266, %v1260
    %v1272 = vmul.f32 %v1270, %v349
    %v1273 = vmul.f32 %v1269, %v350
    %v1274 = vmul.f32 %v1268, %v351
    %v1275 = vmul.f32 %v1271, %v352
    %s1276 = scalar_lea.vmem %s3, 20
    %v1277 = vld [vmem:[%s1276] sm:$0xf]
    %v1279 = vsel %vm45, %v1277, 0
    %v1282 = vsel %vm52, %v1272, 0
    %v1285 = vsel %vm52, %v1273, 0
    %v1288 = vsel %vm52, %v1274, 0
    %v1291 = vsel %vm52, %v1275, 0
    %1293 = vmatprep.subr.mxu0 0.0
    %1294 = vmatpush1.msra.mxu0 0.0
    %1295 = vmatprep.subr.mxu0 0.0
    %1296 = vmatpush1.msra.mxu0 0.0
    %1297 = vmatprep.subr.mxu0 0.0
    %1298 = vmatpush1.msra.mxu0 0.0
    %1299 = vmatprep.subr.mxu0 0.0
    %1300 = vmatpush1.msra.mxu0 0.0
    %1301 = vmatprep.subr.mxu0 0.0
    %1302 = vmatpush1.msra.mxu0 0.0
    %1303 = vmatprep.subr.mxu0 0.0
    %1304 = vmatpush1.msra.mxu0 0.0
    %1305 = vmatprep.subr.mxu0 0.0
    %1306 = vmatpush1.msra.mxu0 0.0
    %1307 = vmatprep.subr.mxu0 0.0
    %1308 = vmatpush1.msra.mxu0 0.0
    %1309 = vmatprep.subr.mxu0 0.0
    %1310 = vmatpush1.msra.mxu0 0.0
    %1311 = vmatprep.subr.mxu0 0.0
    %1312 = vmatpush1.msra.mxu0 0.0
    %1313 = vmatprep.subr.mxu0 0.0
    %1314 = vmatpush1.msra.mxu0 0.0
    %1315 = vmatprep.subr.mxu0 0.0
    %1316 = vmatpush1.msra.mxu0 0.0
    %1317 = vmatprep.subr.mxu0 0.0
    %1318 = vmatpush1.msra.mxu0 0.0
    %1319 = vmatprep.subr.mxu0 0.0
    %1320 = vmatpush1.msra.mxu0 0.0
    %1321 = vmatprep.subr.mxu0 0.0
    %1322 = vmatpush1.msra.mxu0 0.0
    %1323 = vmatprep.subr.mxu0 %v1285
    %1324 = vmatpush1.msra.mxu0 %v1282
    %1325 = vmatprep.subr.mxu0 0.0
    %1326 = vmatpush2.msra.mxu0 0.0
    %1327 = vmatprep.subr.mxu0 0.0
    %1328 = vmatpush2.msra.mxu0 0.0
    %1329 = vmatprep.subr.mxu0 0.0
    %1330 = vmatpush2.msra.mxu0 0.0
    %1331 = vmatprep.subr.mxu0 0.0
    %1332 = vmatpush2.msra.mxu0 0.0
    %1333 = vmatprep.subr.mxu0 0.0
    %1334 = vmatpush2.msra.mxu0 0.0
    %1335 = vmatprep.subr.mxu0 0.0
    %1336 = vmatpush2.msra.mxu0 0.0
    %1337 = vmatprep.subr.mxu0 0.0
    %1338 = vmatpush2.msra.mxu0 0.0
    %1339 = vmatprep.subr.mxu0 0.0
    %1340 = vmatpush2.msra.mxu0 0.0
    %1341 = vmatprep.subr.mxu0 0.0
    %1342 = vmatpush2.msra.mxu0 0.0
    %1343 = vmatprep.subr.mxu0 0.0
    %1344 = vmatpush2.msra.mxu0 0.0
    %1345 = vmatprep.subr.mxu0 0.0
    %1346 = vmatpush2.msra.mxu0 0.0
    %1347 = vmatprep.subr.mxu0 0.0
    %1348 = vmatpush2.msra.mxu0 0.0
    %1349 = vmatprep.subr.mxu0 0.0
    %1350 = vmatpush2.msra.mxu0 0.0
    %1351 = vmatprep.subr.mxu0 0.0
    %1352 = vmatpush2.msra.mxu0 0.0
    %1353 = vmatprep.subr.mxu0 0.0
    %1354 = vmatpush2.msra.mxu0 0.0
    %1355 = vmatprep.subr.mxu0 0.0
    %1356 = vmatpush2.msra.mxu0 0.0
    %1357 = vmatprep.mubr.f32.mxu0 0.0
    %1358 = vmatmul.mubr.f32.gmra.mxu0 %v1279
    %v1359 = vpop.f32.mrf.mxu0
    %v1360 = vadd.f32 0.0, %v1359
    %v1361 = vpop.f32.mrf.mxu0
    %v1362 = vadd.f32 0.0, %v1361
    %1363 = vdwg.mxu0
    %1364 = vmatprep.subr.mxu0 0.0
    %1365 = vmatpush1.msra.mxu0 0.0
    %1366 = vmatprep.subr.mxu0 0.0
    %1367 = vmatpush1.msra.mxu0 0.0
    %1368 = vmatprep.subr.mxu0 0.0
    %1369 = vmatpush1.msra.mxu0 0.0
    %1370 = vmatprep.subr.mxu0 0.0
    %1371 = vmatpush1.msra.mxu0 0.0
    %1372 = vmatprep.subr.mxu0 0.0
    %1373 = vmatpush1.msra.mxu0 0.0
    %1374 = vmatprep.subr.mxu0 0.0
    %1375 = vmatpush1.msra.mxu0 0.0
    %1376 = vmatprep.subr.mxu0 0.0
    %1377 = vmatpush1.msra.mxu0 0.0
    %1378 = vmatprep.subr.mxu0 0.0
    %1379 = vmatpush1.msra.mxu0 0.0
    %1380 = vmatprep.subr.mxu0 0.0
    %1381 = vmatpush1.msra.mxu0 0.0
    %1382 = vmatprep.subr.mxu0 0.0
    %1383 = vmatpush1.msra.mxu0 0.0
    %1384 = vmatprep.subr.mxu0 0.0
    %1385 = vmatpush1.msra.mxu0 0.0
    %1386 = vmatprep.subr.mxu0 0.0
    %1387 = vmatpush1.msra.mxu0 0.0
    %1388 = vmatprep.subr.mxu0 0.0
    %1389 = vmatpush1.msra.mxu0 0.0
    %1390 = vmatprep.subr.mxu0 0.0
    %1391 = vmatpush1.msra.mxu0 0.0
    %1392 = vmatprep.subr.mxu0 0.0
    %1393 = vmatpush1.msra.mxu0 0.0
    %1394 = vmatprep.subr.mxu0 %v1291
    %1395 = vmatpush1.msra.mxu0 %v1288
    %1396 = vmatprep.subr.mxu0 0.0
    %1397 = vmatpush2.msra.mxu0 0.0
    %1398 = vmatprep.subr.mxu0 0.0
    %1399 = vmatpush2.msra.mxu0 0.0
    %1400 = vmatprep.subr.mxu0 0.0
    %1401 = vmatpush2.msra.mxu0 0.0
    %1402 = vmatprep.subr.mxu0 0.0
    %1403 = vmatpush2.msra.mxu0 0.0
    %1404 = vmatprep.subr.mxu0 0.0
    %1405 = vmatpush2.msra.mxu0 0.0
    %1406 = vmatprep.subr.mxu0 0.0
    %1407 = vmatpush2.msra.mxu0 0.0
    %1408 = vmatprep.subr.mxu0 0.0
    %1409 = vmatpush2.msra.mxu0 0.0
    %1410 = vmatprep.subr.mxu0 0.0
    %1411 = vmatpush2.msra.mxu0 0.0
    %1412 = vmatprep.subr.mxu0 0.0
    %1413 = vmatpush2.msra.mxu0 0.0
    %1414 = vmatprep.subr.mxu0 0.0
    %1415 = vmatpush2.msra.mxu0 0.0
    %1416 = vmatprep.subr.mxu0 0.0
    %1417 = vmatpush2.msra.mxu0 0.0
    %1418 = vmatprep.subr.mxu0 0.0
    %1419 = vmatpush2.msra.mxu0 0.0
    %1420 = vmatprep.subr.mxu0 0.0
    %1421 = vmatpush2.msra.mxu0 0.0
    %1422 = vmatprep.subr.mxu0 0.0
    %1423 = vmatpush2.msra.mxu0 0.0
    %1424 = vmatprep.subr.mxu0 0.0
    %1425 = vmatpush2.msra.mxu0 0.0
    %1426 = vmatprep.subr.mxu0 0.0
    %1427 = vmatpush2.msra.mxu0 0.0
    %1428 = vmatprep.mubr.f32.mxu0 0.0
    %1429 = vmatmul.mubr.f32.gmra.mxu0 %v1279
    %v1430 = vpop.f32.mrf.mxu0
    %v1431 = vadd.f32 0.0, %v1430
    %v1432 = vpop.f32.mrf.mxu0
    %v1433 = vadd.f32 0.0, %v1432
    %1434 = vdwg.mxu0
    %v1435 = vadd.f32 %v1255, %v1360
    %v1436 = vadd.f32 %v1256, %v1362
    %v1437 = vadd.f32 %v1257, %v1431
    %v1438 = vadd.f32 %v1258, %v1433
    %1439 = vrot.lane.b32.xlu0 %v224, 113
    %v1440 = vpop.permute.xlu0 %1439
    %1441 = vrot.lane.b32.xlu0 %v225, 113
    %v1442 = vpop.permute.xlu0 %1441
    %1443 = vrot.lane.b32.xlu0 %v226, 113
    %v1444 = vpop.permute.xlu0 %1443
    %1445 = vrot.lane.b32.xlu0 %v227, 113
    %v1446 = vpop.permute.xlu0 %1445
    %vm1447 = vcmp.lt.s32.totalorder %v229, 113
    %v1448 = vsel %vm1447, %v1444, %v1446
    %v1449 = vsel %vm1447, %v1442, %v1444
    %v1450 = vsel %vm1447, %v1440, %v1442
    %v1451 = vsel %vm1447, %v1446, %v1440
    %v1452 = vmul.f32 %v373, %v337
    %v1453 = vmul.f32 %v374, %v338
    %v1454 = vmul.f32 %v375, %v339
    %v1455 = vmul.f32 %v376, %v340
    %v1456 = vmul.f32 %v1450, %v1452
    %v1457 = vmul.f32 %v1449, %v1453
    %v1458 = vmul.f32 %v1448, %v1454
    %v1459 = vmul.f32 %v1451, %v1455
    %s1460 = scalar_lea.vmem %s3, 24
    %v1461 = vld [vmem:[%s1460] sm:$0xf]
    %v1463 = vsel %vm45, %v1461, 0
    %v1466 = vsel %vm52, %v1456, 0
    %v1469 = vsel %vm52, %v1457, 0
    %v1472 = vsel %vm52, %v1458, 0
    %v1475 = vsel %vm52, %v1459, 0
    %1477 = vmatprep.subr.mxu0 0.0
    %1478 = vmatpush1.msra.mxu0 0.0
    %1479 = vmatprep.subr.mxu0 0.0
    %1480 = vmatpush1.msra.mxu0 0.0
    %1481 = vmatprep.subr.mxu0 0.0
    %1482 = vmatpush1.msra.mxu0 0.0
    %1483 = vmatprep.subr.mxu0 0.0
    %1484 = vmatpush1.msra.mxu0 0.0
    %1485 = vmatprep.subr.mxu0 0.0
    %1486 = vmatpush1.msra.mxu0 0.0
    %1487 = vmatprep.subr.mxu0 0.0
    %1488 = vmatpush1.msra.mxu0 0.0
    %1489 = vmatprep.subr.mxu0 0.0
    %1490 = vmatpush1.msra.mxu0 0.0
    %1491 = vmatprep.subr.mxu0 0.0
    %1492 = vmatpush1.msra.mxu0 0.0
    %1493 = vmatprep.subr.mxu0 0.0
    %1494 = vmatpush1.msra.mxu0 0.0
    %1495 = vmatprep.subr.mxu0 0.0
    %1496 = vmatpush1.msra.mxu0 0.0
    %1497 = vmatprep.subr.mxu0 0.0
    %1498 = vmatpush1.msra.mxu0 0.0
    %1499 = vmatprep.subr.mxu0 0.0
    %1500 = vmatpush1.msra.mxu0 0.0
    %1501 = vmatprep.subr.mxu0 0.0
    %1502 = vmatpush1.msra.mxu0 0.0
    %1503 = vmatprep.subr.mxu0 0.0
    %1504 = vmatpush1.msra.mxu0 0.0
    %1505 = vmatprep.subr.mxu0 0.0
    %1506 = vmatpush1.msra.mxu0 0.0
    %1507 = vmatprep.subr.mxu0 %v1469
    %1508 = vmatpush1.msra.mxu0 %v1466
    %1509 = vmatprep.subr.mxu0 0.0
    %1510 = vmatpush2.msra.mxu0 0.0
    %1511 = vmatprep.subr.mxu0 0.0
    %1512 = vmatpush2.msra.mxu0 0.0
    %1513 = vmatprep.subr.mxu0 0.0
    %1514 = vmatpush2.msra.mxu0 0.0
    %1515 = vmatprep.subr.mxu0 0.0
    %1516 = vmatpush2.msra.mxu0 0.0
    %1517 = vmatprep.subr.mxu0 0.0
    %1518 = vmatpush2.msra.mxu0 0.0
    %1519 = vmatprep.subr.mxu0 0.0
    %1520 = vmatpush2.msra.mxu0 0.0
    %1521 = vmatprep.subr.mxu0 0.0
    %1522 = vmatpush2.msra.mxu0 0.0
    %1523 = vmatprep.subr.mxu0 0.0
    %1524 = vmatpush2.msra.mxu0 0.0
    %1525 = vmatprep.subr.mxu0 0.0
    %1526 = vmatpush2.msra.mxu0 0.0
    %1527 = vmatprep.subr.mxu0 0.0
    %1528 = vmatpush2.msra.mxu0 0.0
    %1529 = vmatprep.subr.mxu0 0.0
    %1530 = vmatpush2.msra.mxu0 0.0
    %1531 = vmatprep.subr.mxu0 0.0
    %1532 = vmatpush2.msra.mxu0 0.0
    %1533 = vmatprep.subr.mxu0 0.0
    %1534 = vmatpush2.msra.mxu0 0.0
    %1535 = vmatprep.subr.mxu0 0.0
    %1536 = vmatpush2.msra.mxu0 0.0
    %1537 = vmatprep.subr.mxu0 0.0
    %1538 = vmatpush2.msra.mxu0 0.0
    %1539 = vmatprep.subr.mxu0 0.0
    %1540 = vmatpush2.msra.mxu0 0.0
    %1541 = vmatprep.mubr.f32.mxu0 0.0
    %1542 = vmatmul.mubr.f32.gmra.mxu0 %v1463
    %v1543 = vpop.f32.mrf.mxu0
    %v1544 = vadd.f32 0.0, %v1543
    %v1545 = vpop.f32.mrf.mxu0
    %v1546 = vadd.f32 0.0, %v1545
    %1547 = vdwg.mxu0
    %1548 = vmatprep.subr.mxu0 0.0
    %1549 = vmatpush1.msra.mxu0 0.0
    %1550 = vmatprep.subr.mxu0 0.0
    %1551 = vmatpush1.msra.mxu0 0.0
    %1552 = vmatprep.subr.mxu0 0.0
    %1553 = vmatpush1.msra.mxu0 0.0
    %1554 = vmatprep.subr.mxu0 0.0
    %1555 = vmatpush1.msra.mxu0 0.0
    %1556 = vmatprep.subr.mxu0 0.0
    %1557 = vmatpush1.msra.mxu0 0.0
    %1558 = vmatprep.subr.mxu0 0.0
    %1559 = vmatpush1.msra.mxu0 0.0
    %1560 = vmatprep.subr.mxu0 0.0
    %1561 = vmatpush1.msra.mxu0 0.0
    %1562 = vmatprep.subr.mxu0 0.0
    %1563 = vmatpush1.msra.mxu0 0.0
    %1564 = vmatprep.subr.mxu0 0.0
    %1565 = vmatpush1.msra.mxu0 0.0
    %1566 = vmatprep.subr.mxu0 0.0
    %1567 = vmatpush1.msra.mxu0 0.0
    %1568 = vmatprep.subr.mxu0 0.0
    %1569 = vmatpush1.msra.mxu0 0.0
    %1570 = vmatprep.subr.mxu0 0.0
    %1571 = vmatpush1.msra.mxu0 0.0
    %1572 = vmatprep.subr.mxu0 0.0
    %1573 = vmatpush1.msra.mxu0 0.0
    %1574 = vmatprep.subr.mxu0 0.0
    %1575 = vmatpush1.msra.mxu0 0.0
    %1576 = vmatprep.subr.mxu0 0.0
    %1577 = vmatpush1.msra.mxu0 0.0
    %1578 = vmatprep.subr.mxu0 %v1475
    %1579 = vmatpush1.msra.mxu0 %v1472
    %1580 = vmatprep.subr.mxu0 0.0
    %1581 = vmatpush2.msra.mxu0 0.0
    %1582 = vmatprep.subr.mxu0 0.0
    %1583 = vmatpush2.msra.mxu0 0.0
    %1584 = vmatprep.subr.mxu0 0.0
    %1585 = vmatpush2.msra.mxu0 0.0
    %1586 = vmatprep.subr.mxu0 0.0
    %1587 = vmatpush2.msra.mxu0 0.0
    %1588 = vmatprep.subr.mxu0 0.0
    %1589 = vmatpush2.msra.mxu0 0.0
    %1590 = vmatprep.subr.mxu0 0.0
    %1591 = vmatpush2.msra.mxu0 0.0
    %1592 = vmatprep.subr.mxu0 0.0
    %1593 = vmatpush2.msra.mxu0 0.0
    %1594 = vmatprep.subr.mxu0 0.0
    %1595 = vmatpush2.msra.mxu0 0.0
    %1596 = vmatprep.subr.mxu0 0.0
    %1597 = vmatpush2.msra.mxu0 0.0
    %1598 = vmatprep.subr.mxu0 0.0
    %1599 = vmatpush2.msra.mxu0 0.0
    %1600 = vmatprep.subr.mxu0 0.0
    %1601 = vmatpush2.msra.mxu0 0.0
    %1602 = vmatprep.subr.mxu0 0.0
    %1603 = vmatpush2.msra.mxu0 0.0
    %1604 = vmatprep.subr.mxu0 0.0
    %1605 = vmatpush2.msra.mxu0 0.0
    %1606 = vmatprep.subr.mxu0 0.0
    %1607 = vmatpush2.msra.mxu0 0.0
    %1608 = vmatprep.subr.mxu0 0.0
    %1609 = vmatpush2.msra.mxu0 0.0
    %1610 = vmatprep.subr.mxu0 0.0
    %1611 = vmatpush2.msra.mxu0 0.0
    %1612 = vmatprep.mubr.f32.mxu0 0.0
    %1613 = vmatmul.mubr.f32.gmra.mxu0 %v1463
    %v1614 = vpop.f32.mrf.mxu0
    %v1615 = vadd.f32 0.0, %v1614
    %v1616 = vpop.f32.mrf.mxu0
    %v1617 = vadd.f32 0.0, %v1616
    %1618 = vdwg.mxu0
    %v1619 = vadd.f32 %v1435, %v1544
    %v1620 = vadd.f32 %v1436, %v1546
    %v1621 = vadd.f32 %v1437, %v1615
    %v1622 = vadd.f32 %v1438, %v1617
    %1623 = vrot.lane.b32.xlu0 %v224, 112
    %v1624 = vpop.permute.xlu0 %1623
    %1625 = vrot.lane.b32.xlu0 %v225, 112
    %v1626 = vpop.permute.xlu0 %1625
    %1627 = vrot.lane.b32.xlu0 %v226, 112
    %v1628 = vpop.permute.xlu0 %1627
    %1629 = vrot.lane.b32.xlu0 %v227, 112
    %v1630 = vpop.permute.xlu0 %1629
    %vm1631 = vcmp.lt.s32.totalorder %v229, 112
    %v1632 = vsel %vm1631, %v1628, %v1630
    %v1633 = vsel %vm1631, %v1626, %v1628
    %v1634 = vsel %vm1631, %v1624, %v1626
    %v1635 = vsel %vm1631, %v1630, %v1624
    %v1636 = vmul.f32 %v1634, %v373
    %v1637 = vmul.f32 %v1633, %v374
    %v1638 = vmul.f32 %v1632, %v375
    %v1639 = vmul.f32 %v1635, %v376
    %s1640 = scalar_lea.vmem %s3, 28
    %v1641 = vld [vmem:[%s1640] sm:$0xf]
    %v1643 = vsel %vm45, %v1641, 0
    %v1646 = vsel %vm52, %v1636, 0
    %v1649 = vsel %vm52, %v1637, 0
    %v1652 = vsel %vm52, %v1638, 0
    %v1655 = vsel %vm52, %v1639, 0
    %1657 = vmatprep.subr.mxu0 0.0
    %1658 = vmatpush1.msra.mxu0 0.0
    %1659 = vmatprep.subr.mxu0 0.0
    %1660 = vmatpush1.msra.mxu0 0.0
    %1661 = vmatprep.subr.mxu0 0.0
    %1662 = vmatpush1.msra.mxu0 0.0
    %1663 = vmatprep.subr.mxu0 0.0
    %1664 = vmatpush1.msra.mxu0 0.0
    %1665 = vmatprep.subr.mxu0 0.0
    %1666 = vmatpush1.msra.mxu0 0.0
    %1667 = vmatprep.subr.mxu0 0.0
    %1668 = vmatpush1.msra.mxu0 0.0
    %1669 = vmatprep.subr.mxu0 0.0
    %1670 = vmatpush1.msra.mxu0 0.0
    %1671 = vmatprep.subr.mxu0 0.0
    %1672 = vmatpush1.msra.mxu0 0.0
    %1673 = vmatprep.subr.mxu0 0.0
    %1674 = vmatpush1.msra.mxu0 0.0
    %1675 = vmatprep.subr.mxu0 0.0
    %1676 = vmatpush1.msra.mxu0 0.0
    %1677 = vmatprep.subr.mxu0 0.0
    %1678 = vmatpush1.msra.mxu0 0.0
    %1679 = vmatprep.subr.mxu0 0.0
    %1680 = vmatpush1.msra.mxu0 0.0
    %1681 = vmatprep.subr.mxu0 0.0
    %1682 = vmatpush1.msra.mxu0 0.0
    %1683 = vmatprep.subr.mxu0 0.0
    %1684 = vmatpush1.msra.mxu0 0.0
    %1685 = vmatprep.subr.mxu0 0.0
    %1686 = vmatpush1.msra.mxu0 0.0
    %1687 = vmatprep.subr.mxu0 %v1649
    %1688 = vmatpush1.msra.mxu0 %v1646
    %1689 = vmatprep.subr.mxu0 0.0
    %1690 = vmatpush2.msra.mxu0 0.0
    %1691 = vmatprep.subr.mxu0 0.0
    %1692 = vmatpush2.msra.mxu0 0.0
    %1693 = vmatprep.subr.mxu0 0.0
    %1694 = vmatpush2.msra.mxu0 0.0
    %1695 = vmatprep.subr.mxu0 0.0
    %1696 = vmatpush2.msra.mxu0 0.0
    %1697 = vmatprep.subr.mxu0 0.0
    %1698 = vmatpush2.msra.mxu0 0.0
    %1699 = vmatprep.subr.mxu0 0.0
    %1700 = vmatpush2.msra.mxu0 0.0
    %1701 = vmatprep.subr.mxu0 0.0
    %1702 = vmatpush2.msra.mxu0 0.0
    %1703 = vmatprep.subr.mxu0 0.0
    %1704 = vmatpush2.msra.mxu0 0.0
    %1705 = vmatprep.subr.mxu0 0.0
    %1706 = vmatpush2.msra.mxu0 0.0
    %1707 = vmatprep.subr.mxu0 0.0
    %1708 = vmatpush2.msra.mxu0 0.0
    %1709 = vmatprep.subr.mxu0 0.0
    %1710 = vmatpush2.msra.mxu0 0.0
    %1711 = vmatprep.subr.mxu0 0.0
    %1712 = vmatpush2.msra.mxu0 0.0
    %1713 = vmatprep.subr.mxu0 0.0
    %1714 = vmatpush2.msra.mxu0 0.0
    %1715 = vmatprep.subr.mxu0 0.0
    %1716 = vmatpush2.msra.mxu0 0.0
    %1717 = vmatprep.subr.mxu0 0.0
    %1718 = vmatpush2.msra.mxu0 0.0
    %1719 = vmatprep.subr.mxu0 0.0
    %1720 = vmatpush2.msra.mxu0 0.0
    %1721 = vmatprep.mubr.f32.mxu0 0.0
    %1722 = vmatmul.mubr.f32.gmra.mxu0 %v1643
    %v1723 = vpop.f32.mrf.mxu0
    %v1724 = vadd.f32 0.0, %v1723
    %v1725 = vpop.f32.mrf.mxu0
    %v1726 = vadd.f32 0.0, %v1725
    %1727 = vdwg.mxu0
    %1728 = vmatprep.subr.mxu0 0.0
    %1729 = vmatpush1.msra.mxu0 0.0
    %1730 = vmatprep.subr.mxu0 0.0
    %1731 = vmatpush1.msra.mxu0 0.0
    %1732 = vmatprep.subr.mxu0 0.0
    %1733 = vmatpush1.msra.mxu0 0.0
    %1734 = vmatprep.subr.mxu0 0.0
    %1735 = vmatpush1.msra.mxu0 0.0
    %1736 = vmatprep.subr.mxu0 0.0
    %1737 = vmatpush1.msra.mxu0 0.0
    %1738 = vmatprep.subr.mxu0 0.0
    %1739 = vmatpush1.msra.mxu0 0.0
    %1740 = vmatprep.subr.mxu0 0.0
    %1741 = vmatpush1.msra.mxu0 0.0
    %1742 = vmatprep.subr.mxu0 0.0
    %1743 = vmatpush1.msra.mxu0 0.0
    %1744 = vmatprep.subr.mxu0 0.0
    %1745 = vmatpush1.msra.mxu0 0.0
    %1746 = vmatprep.subr.mxu0 0.0
    %1747 = vmatpush1.msra.mxu0 0.0
    %1748 = vmatprep.subr.mxu0 0.0
    %1749 = vmatpush1.msra.mxu0 0.0
    %1750 = vmatprep.subr.mxu0 0.0
    %1751 = vmatpush1.msra.mxu0 0.0
    %1752 = vmatprep.subr.mxu0 0.0
    %1753 = vmatpush1.msra.mxu0 0.0
    %1754 = vmatprep.subr.mxu0 0.0
    %1755 = vmatpush1.msra.mxu0 0.0
    %1756 = vmatprep.subr.mxu0 0.0
    %1757 = vmatpush1.msra.mxu0 0.0
    %1758 = vmatprep.subr.mxu0 %v1655
    %1759 = vmatpush1.msra.mxu0 %v1652
    %1760 = vmatprep.subr.mxu0 0.0
    %1761 = vmatpush2.msra.mxu0 0.0
    %1762 = vmatprep.subr.mxu0 0.0
    %1763 = vmatpush2.msra.mxu0 0.0
    %1764 = vmatprep.subr.mxu0 0.0
    %1765 = vmatpush2.msra.mxu0 0.0
    %1766 = vmatprep.subr.mxu0 0.0
    %1767 = vmatpush2.msra.mxu0 0.0
    %1768 = vmatprep.subr.mxu0 0.0
    %1769 = vmatpush2.msra.mxu0 0.0
    %1770 = vmatprep.subr.mxu0 0.0
    %1771 = vmatpush2.msra.mxu0 0.0
    %1772 = vmatprep.subr.mxu0 0.0
    %1773 = vmatpush2.msra.mxu0 0.0
    %1774 = vmatprep.subr.mxu0 0.0
    %1775 = vmatpush2.msra.mxu0 0.0
    %1776 = vmatprep.subr.mxu0 0.0
    %1777 = vmatpush2.msra.mxu0 0.0
    %1778 = vmatprep.subr.mxu0 0.0
    %1779 = vmatpush2.msra.mxu0 0.0
    %1780 = vmatprep.subr.mxu0 0.0
    %1781 = vmatpush2.msra.mxu0 0.0
    %1782 = vmatprep.subr.mxu0 0.0
    %1783 = vmatpush2.msra.mxu0 0.0
    %1784 = vmatprep.subr.mxu0 0.0
    %1785 = vmatpush2.msra.mxu0 0.0
    %1786 = vmatprep.subr.mxu0 0.0
    %1787 = vmatpush2.msra.mxu0 0.0
    %1788 = vmatprep.subr.mxu0 0.0
    %1789 = vmatpush2.msra.mxu0 0.0
    %1790 = vmatprep.subr.mxu0 0.0
    %1791 = vmatpush2.msra.mxu0 0.0
    %1792 = vmatprep.mubr.f32.mxu0 0.0
    %1793 = vmatmul.mubr.f32.gmra.mxu0 %v1643
    %v1794 = vpop.f32.mrf.mxu0
    %v1795 = vadd.f32 0.0, %v1794
    %v1796 = vpop.f32.mrf.mxu0
    %v1797 = vadd.f32 0.0, %v1796
    %1798 = vdwg.mxu0
    %v1799 = vadd.f32 %v1619, %v1724
    %v1800 = vadd.f32 %v1620, %v1726
    %v1801 = vadd.f32 %v1621, %v1795
    %v1802 = vadd.f32 %v1622, %v1797
    %1803 = vrot.lane.b32.xlu0 %v224, 111
    %v1804 = vpop.permute.xlu0 %1803
    %1805 = vrot.lane.b32.xlu0 %v225, 111
    %v1806 = vpop.permute.xlu0 %1805
    %1807 = vrot.lane.b32.xlu0 %v226, 111
    %v1808 = vpop.permute.xlu0 %1807
    %1809 = vrot.lane.b32.xlu0 %v227, 111
    %v1810 = vpop.permute.xlu0 %1809
    %vm1811 = vcmp.lt.s32.totalorder %v229, 111
    %v1812 = vsel %vm1811, %v1808, %v1810
    %v1813 = vsel %vm1811, %v1806, %v1808
    %v1814 = vsel %vm1811, %v1804, %v1806
    %v1815 = vsel %vm1811, %v1810, %v1804
    %v1816 = vmul.f32 %v373, %v349
    %v1817 = vmul.f32 %v374, %v350
    %v1818 = vmul.f32 %v375, %v351
    %v1819 = vmul.f32 %v376, %v352
    %v1820 = vmul.f32 %v1814, %v1816
    %v1821 = vmul.f32 %v1813, %v1817
    %v1822 = vmul.f32 %v1812, %v1818
    %v1823 = vmul.f32 %v1815, %v1819
    %s1824 = scalar_lea.vmem %s3, 32
    %v1825 = vld [vmem:[%s1824] sm:$0xf]
    %v1827 = vsel %vm45, %v1825, 0
    %v1830 = vsel %vm52, %v1820, 0
    %v1833 = vsel %vm52, %v1821, 0
    %v1836 = vsel %vm52, %v1822, 0
    %v1839 = vsel %vm52, %v1823, 0
    %1841 = vmatprep.subr.mxu0 0.0
    %1842 = vmatpush1.msra.mxu0 0.0
    %1843 = vmatprep.subr.mxu0 0.0
    %1844 = vmatpush1.msra.mxu0 0.0
    %1845 = vmatprep.subr.mxu0 0.0
    %1846 = vmatpush1.msra.mxu0 0.0
    %1847 = vmatprep.subr.mxu0 0.0
    %1848 = vmatpush1.msra.mxu0 0.0
    %1849 = vmatprep.subr.mxu0 0.0
    %1850 = vmatpush1.msra.mxu0 0.0
    %1851 = vmatprep.subr.mxu0 0.0
    %1852 = vmatpush1.msra.mxu0 0.0
    %1853 = vmatprep.subr.mxu0 0.0
    %1854 = vmatpush1.msra.mxu0 0.0
    %1855 = vmatprep.subr.mxu0 0.0
    %1856 = vmatpush1.msra.mxu0 0.0
    %1857 = vmatprep.subr.mxu0 0.0
    %1858 = vmatpush1.msra.mxu0 0.0
    %1859 = vmatprep.subr.mxu0 0.0
    %1860 = vmatpush1.msra.mxu0 0.0
    %1861 = vmatprep.subr.mxu0 0.0
    %1862 = vmatpush1.msra.mxu0 0.0
    %1863 = vmatprep.subr.mxu0 0.0
    %1864 = vmatpush1.msra.mxu0 0.0
    %1865 = vmatprep.subr.mxu0 0.0
    %1866 = vmatpush1.msra.mxu0 0.0
    %1867 = vmatprep.subr.mxu0 0.0
    %1868 = vmatpush1.msra.mxu0 0.0
    %1869 = vmatprep.subr.mxu0 0.0
    %1870 = vmatpush1.msra.mxu0 0.0
    %1871 = vmatprep.subr.mxu0 %v1833
    %1872 = vmatpush1.msra.mxu0 %v1830
    %1873 = vmatprep.subr.mxu0 0.0
    %1874 = vmatpush2.msra.mxu0 0.0
    %1875 = vmatprep.subr.mxu0 0.0
    %1876 = vmatpush2.msra.mxu0 0.0
    %1877 = vmatprep.subr.mxu0 0.0
    %1878 = vmatpush2.msra.mxu0 0.0
    %1879 = vmatprep.subr.mxu0 0.0
    %1880 = vmatpush2.msra.mxu0 0.0
    %1881 = vmatprep.subr.mxu0 0.0
    %1882 = vmatpush2.msra.mxu0 0.0
    %1883 = vmatprep.subr.mxu0 0.0
    %1884 = vmatpush2.msra.mxu0 0.0
    %1885 = vmatprep.subr.mxu0 0.0
    %1886 = vmatpush2.msra.mxu0 0.0
    %1887 = vmatprep.subr.mxu0 0.0
    %1888 = vmatpush2.msra.mxu0 0.0
    %1889 = vmatprep.subr.mxu0 0.0
    %1890 = vmatpush2.msra.mxu0 0.0
    %1891 = vmatprep.subr.mxu0 0.0
    %1892 = vmatpush2.msra.mxu0 0.0
    %1893 = vmatprep.subr.mxu0 0.0
    %1894 = vmatpush2.msra.mxu0 0.0
    %1895 = vmatprep.subr.mxu0 0.0
    %1896 = vmatpush2.msra.mxu0 0.0
    %1897 = vmatprep.subr.mxu0 0.0
    %1898 = vmatpush2.msra.mxu0 0.0
    %1899 = vmatprep.subr.mxu0 0.0
    %1900 = vmatpush2.msra.mxu0 0.0
    %1901 = vmatprep.subr.mxu0 0.0
    %1902 = vmatpush2.msra.mxu0 0.0
    %1903 = vmatprep.subr.mxu0 0.0
    %1904 = vmatpush2.msra.mxu0 0.0
    %1905 = vmatprep.mubr.f32.mxu0 0.0
    %1906 = vmatmul.mubr.f32.gmra.mxu0 %v1827
    %v1907 = vpop.f32.mrf.mxu0
    %v1908 = vadd.f32 0.0, %v1907
    %v1909 = vpop.f32.mrf.mxu0
    %v1910 = vadd.f32 0.0, %v1909
    %1911 = vdwg.mxu0
    %1912 = vmatprep.subr.mxu0 0.0
    %1913 = vmatpush1.msra.mxu0 0.0
    %1914 = vmatprep.subr.mxu0 0.0
    %1915 = vmatpush1.msra.mxu0 0.0
    %1916 = vmatprep.subr.mxu0 0.0
    %1917 = vmatpush1.msra.mxu0 0.0
    %1918 = vmatprep.subr.mxu0 0.0
    %1919 = vmatpush1.msra.mxu0 0.0
    %1920 = vmatprep.subr.mxu0 0.0
    %1921 = vmatpush1.msra.mxu0 0.0
    %1922 = vmatprep.subr.mxu0 0.0
    %1923 = vmatpush1.msra.mxu0 0.0
    %1924 = vmatprep.subr.mxu0 0.0
    %1925 = vmatpush1.msra.mxu0 0.0
    %1926 = vmatprep.subr.mxu0 0.0
    %1927 = vmatpush1.msra.mxu0 0.0
    %1928 = vmatprep.subr.mxu0 0.0
    %1929 = vmatpush1.msra.mxu0 0.0
    %1930 = vmatprep.subr.mxu0 0.0
    %1931 = vmatpush1.msra.mxu0 0.0
    %1932 = vmatprep.subr.mxu0 0.0
    %1933 = vmatpush1.msra.mxu0 0.0
    %1934 = vmatprep.subr.mxu0 0.0
    %1935 = vmatpush1.msra.mxu0 0.0
    %1936 = vmatprep.subr.mxu0 0.0
    %1937 = vmatpush1.msra.mxu0 0.0
    %1938 = vmatprep.subr.mxu0 0.0
    %1939 = vmatpush1.msra.mxu0 0.0
    %1940 = vmatprep.subr.mxu0 0.0
    %1941 = vmatpush1.msra.mxu0 0.0
    %1942 = vmatprep.subr.mxu0 %v1839
    %1943 = vmatpush1.msra.mxu0 %v1836
    %1944 = vmatprep.subr.mxu0 0.0
    %1945 = vmatpush2.msra.mxu0 0.0
    %1946 = vmatprep.subr.mxu0 0.0
    %1947 = vmatpush2.msra.mxu0 0.0
    %1948 = vmatprep.subr.mxu0 0.0
    %1949 = vmatpush2.msra.mxu0 0.0
    %1950 = vmatprep.subr.mxu0 0.0
    %1951 = vmatpush2.msra.mxu0 0.0
    %1952 = vmatprep.subr.mxu0 0.0
    %1953 = vmatpush2.msra.mxu0 0.0
    %1954 = vmatprep.subr.mxu0 0.0
    %1955 = vmatpush2.msra.mxu0 0.0
    %1956 = vmatprep.subr.mxu0 0.0
    %1957 = vmatpush2.msra.mxu0 0.0
    %1958 = vmatprep.subr.mxu0 0.0
    %1959 = vmatpush2.msra.mxu0 0.0
    %1960 = vmatprep.subr.mxu0 0.0
    %1961 = vmatpush2.msra.mxu0 0.0
    %1962 = vmatprep.subr.mxu0 0.0
    %1963 = vmatpush2.msra.mxu0 0.0
    %1964 = vmatprep.subr.mxu0 0.0
    %1965 = vmatpush2.msra.mxu0 0.0
    %1966 = vmatprep.subr.mxu0 0.0
    %1967 = vmatpush2.msra.mxu0 0.0
    %1968 = vmatprep.subr.mxu0 0.0
    %1969 = vmatpush2.msra.mxu0 0.0
    %1970 = vmatprep.subr.mxu0 0.0
    %1971 = vmatpush2.msra.mxu0 0.0
    %1972 = vmatprep.subr.mxu0 0.0
    %1973 = vmatpush2.msra.mxu0 0.0
    %1974 = vmatprep.subr.mxu0 0.0
    %1975 = vmatpush2.msra.mxu0 0.0
    %1976 = vmatprep.mubr.f32.mxu0 0.0
    %1977 = vmatmul.mubr.f32.gmra.mxu0 %v1827
    %v1978 = vpop.f32.mrf.mxu0
    %v1979 = vadd.f32 0.0, %v1978
    %v1980 = vpop.f32.mrf.mxu0
    %v1981 = vadd.f32 0.0, %v1980
    %1982 = vdwg.mxu0
    %v1983 = vadd.f32 %v1799, %v1908
    %v1984 = vadd.f32 %v1800, %v1910
    %v1985 = vadd.f32 %v1801, %v1979
    %v1986 = vadd.f32 %v1802, %v1981
    %vm1987 = vcmp.ge.f32.partialorder %v1983, 0.0
    %vm1988 = vcmp.ge.f32.partialorder %v1984, 0.0
    %vm1989 = vcmp.ge.f32.partialorder %v1985, 0.0
    %vm1990 = vcmp.ge.f32.partialorder %v1986, 0.0
    %v1991 = vstv %s35
    %v1992 = vmul.f32 %v1991, %v1983
    %v1993 = vmul.f32 %v1991, %v1984
    %v1994 = vmul.f32 %v1991, %v1985
    %v1995 = vmul.f32 %v1991, %v1986
    %v1996 = vsel %vm1987, %v1983, %v1992
    %v1997 = vsel %vm1988, %v1984, %v1993
    %v1998 = vsel %vm1989, %v1985, %v1994
    %v1999 = vsel %vm1990, %v1986, %v1995
    %v2000 = vld [vmem:[%s4] sm:$0xff]
    %v2002 = vsel %vm45, %v2000, 0
    %v2005 = vsel %vm52, %v1996, 0
    %v2008 = vsel %vm52, %v1997, 0
    %v2011 = vsel %vm52, %v1998, 0
    %v2014 = vsel %vm52, %v1999, 0
    %2016 = vmatprep.subr.mxu0 0.0
    %2017 = vmatpush1.msra.mxu0 0.0
    %2018 = vmatprep.subr.mxu0 0.0
    %2019 = vmatpush1.msra.mxu0 0.0
    %2020 = vmatprep.subr.mxu0 0.0
    %2021 = vmatpush1.msra.mxu0 0.0
    %2022 = vmatprep.subr.mxu0 0.0
    %2023 = vmatpush1.msra.mxu0 0.0
    %2024 = vmatprep.subr.mxu0 0.0
    %2025 = vmatpush1.msra.mxu0 0.0
    %2026 = vmatprep.subr.mxu0 0.0
    %2027 = vmatpush1.msra.mxu0 0.0
    %2028 = vmatprep.subr.mxu0 0.0
    %2029 = vmatpush1.msra.mxu0 0.0
    %2030 = vmatprep.subr.mxu0 0.0
    %2031 = vmatpush1.msra.mxu0 0.0
    %2032 = vmatprep.subr.mxu0 0.0
    %2033 = vmatpush1.msra.mxu0 0.0
    %2034 = vmatprep.subr.mxu0 0.0
    %2035 = vmatpush1.msra.mxu0 0.0
    %2036 = vmatprep.subr.mxu0 0.0
    %2037 = vmatpush1.msra.mxu0 0.0
    %2038 = vmatprep.subr.mxu0 0.0
    %2039 = vmatpush1.msra.mxu0 0.0
    %2040 = vmatprep.subr.mxu0 0.0
    %2041 = vmatpush1.msra.mxu0 0.0
    %2042 = vmatprep.subr.mxu0 0.0
    %2043 = vmatpush1.msra.mxu0 0.0
    %2044 = vmatprep.subr.mxu0 0.0
    %2045 = vmatpush1.msra.mxu0 0.0
    %2046 = vmatprep.subr.mxu0 %v2008
    %2047 = vmatpush1.msra.mxu0 %v2005
    %2048 = vmatprep.subr.mxu0 0.0
    %2049 = vmatpush2.msra.mxu0 0.0
    %2050 = vmatprep.subr.mxu0 0.0
    %2051 = vmatpush2.msra.mxu0 0.0
    %2052 = vmatprep.subr.mxu0 0.0
    %2053 = vmatpush2.msra.mxu0 0.0
    %2054 = vmatprep.subr.mxu0 0.0
    %2055 = vmatpush2.msra.mxu0 0.0
    %2056 = vmatprep.subr.mxu0 0.0
    %2057 = vmatpush2.msra.mxu0 0.0
    %2058 = vmatprep.subr.mxu0 0.0
    %2059 = vmatpush2.msra.mxu0 0.0
    %2060 = vmatprep.subr.mxu0 0.0
    %2061 = vmatpush2.msra.mxu0 0.0
    %2062 = vmatprep.subr.mxu0 0.0
    %2063 = vmatpush2.msra.mxu0 0.0
    %2064 = vmatprep.subr.mxu0 0.0
    %2065 = vmatpush2.msra.mxu0 0.0
    %2066 = vmatprep.subr.mxu0 0.0
    %2067 = vmatpush2.msra.mxu0 0.0
    %2068 = vmatprep.subr.mxu0 0.0
    %2069 = vmatpush2.msra.mxu0 0.0
    %2070 = vmatprep.subr.mxu0 0.0
    %2071 = vmatpush2.msra.mxu0 0.0
    %2072 = vmatprep.subr.mxu0 0.0
    %2073 = vmatpush2.msra.mxu0 0.0
    %2074 = vmatprep.subr.mxu0 0.0
    %2075 = vmatpush2.msra.mxu0 0.0
    %2076 = vmatprep.subr.mxu0 0.0
    %2077 = vmatpush2.msra.mxu0 0.0
    %2078 = vmatprep.subr.mxu0 0.0
    %2079 = vmatpush2.msra.mxu0 0.0
    %2080 = vmatprep.mubr.f32.mxu0 0.0
    %2081 = vmatmul.mubr.f32.gmra.mxu0 %v2002
    %v2082 = vpop.f32.mrf.mxu0
    %v2083 = vadd.f32 %v128, %v2082
    %v2084 = vpop.f32.mrf.mxu0
    %v2085 = vadd.f32 %v130, %v2084
    %2086 = vdwg.mxu0
    %2087 = vmatprep.subr.mxu0 0.0
    %2088 = vmatpush1.msra.mxu0 0.0
    %2089 = vmatprep.subr.mxu0 0.0
    %2090 = vmatpush1.msra.mxu0 0.0
    %2091 = vmatprep.subr.mxu0 0.0
    %2092 = vmatpush1.msra.mxu0 0.0
    %2093 = vmatprep.subr.mxu0 0.0
    %2094 = vmatpush1.msra.mxu0 0.0
    %2095 = vmatprep.subr.mxu0 0.0
    %2096 = vmatpush1.msra.mxu0 0.0
    %2097 = vmatprep.subr.mxu0 0.0
    %2098 = vmatpush1.msra.mxu0 0.0
    %2099 = vmatprep.subr.mxu0 0.0
    %2100 = vmatpush1.msra.mxu0 0.0
    %2101 = vmatprep.subr.mxu0 0.0
    %2102 = vmatpush1.msra.mxu0 0.0
    %2103 = vmatprep.subr.mxu0 0.0
    %2104 = vmatpush1.msra.mxu0 0.0
    %2105 = vmatprep.subr.mxu0 0.0
    %2106 = vmatpush1.msra.mxu0 0.0
    %2107 = vmatprep.subr.mxu0 0.0
    %2108 = vmatpush1.msra.mxu0 0.0
    %2109 = vmatprep.subr.mxu0 0.0
    %2110 = vmatpush1.msra.mxu0 0.0
    %2111 = vmatprep.subr.mxu0 0.0
    %2112 = vmatpush1.msra.mxu0 0.0
    %2113 = vmatprep.subr.mxu0 0.0
    %2114 = vmatpush1.msra.mxu0 0.0
    %2115 = vmatprep.subr.mxu0 0.0
    %2116 = vmatpush1.msra.mxu0 0.0
    %2117 = vmatprep.subr.mxu0 %v2014
    %2118 = vmatpush1.msra.mxu0 %v2011
    %2119 = vmatprep.subr.mxu0 0.0
    %2120 = vmatpush2.msra.mxu0 0.0
    %2121 = vmatprep.subr.mxu0 0.0
    %2122 = vmatpush2.msra.mxu0 0.0
    %2123 = vmatprep.subr.mxu0 0.0
    %2124 = vmatpush2.msra.mxu0 0.0
    %2125 = vmatprep.subr.mxu0 0.0
    %2126 = vmatpush2.msra.mxu0 0.0
    %2127 = vmatprep.subr.mxu0 0.0
    %2128 = vmatpush2.msra.mxu0 0.0
    %2129 = vmatprep.subr.mxu0 0.0
    %2130 = vmatpush2.msra.mxu0 0.0
    %2131 = vmatprep.subr.mxu0 0.0
    %2132 = vmatpush2.msra.mxu0 0.0
    %2133 = vmatprep.subr.mxu0 0.0
    %2134 = vmatpush2.msra.mxu0 0.0
    %2135 = vmatprep.subr.mxu0 0.0
    %2136 = vmatpush2.msra.mxu0 0.0
    %2137 = vmatprep.subr.mxu0 0.0
    %2138 = vmatpush2.msra.mxu0 0.0
    %2139 = vmatprep.subr.mxu0 0.0
    %2140 = vmatpush2.msra.mxu0 0.0
    %2141 = vmatprep.subr.mxu0 0.0
    %2142 = vmatpush2.msra.mxu0 0.0
    %2143 = vmatprep.subr.mxu0 0.0
    %2144 = vmatpush2.msra.mxu0 0.0
    %2145 = vmatprep.subr.mxu0 0.0
    %2146 = vmatpush2.msra.mxu0 0.0
    %2147 = vmatprep.subr.mxu0 0.0
    %2148 = vmatpush2.msra.mxu0 0.0
    %2149 = vmatprep.subr.mxu0 0.0
    %2150 = vmatpush2.msra.mxu0 0.0
    %2151 = vmatprep.mubr.f32.mxu0 0.0
    %2152 = vmatmul.mubr.f32.gmra.mxu0 %v2002
    %v2153 = vpop.f32.mrf.mxu0
    %v2154 = vadd.f32 %v205, %v2153
    %v2155 = vpop.f32.mrf.mxu0
    %v2156 = vadd.f32 %v207, %v2155
    %2157 = vdwg.mxu0
    %vm2158 = vcmp.ge.f32.partialorder %v2083, 0.0
    %vm2159 = vcmp.ge.f32.partialorder %v2085, 0.0
    %vm2160 = vcmp.ge.f32.partialorder %v2154, 0.0
    %vm2161 = vcmp.ge.f32.partialorder %v2156, 0.0
    %v2162 = vstv %s36
    %v2163 = vmul.f32 %v2162, %v2083
    %v2164 = vmul.f32 %v2162, %v2085
    %v2165 = vmul.f32 %v2162, %v2154
    %v2166 = vmul.f32 %v2162, %v2156
    %v2167 = vsel %vm2158, %v2083, %v2163
    %v2168 = vsel %vm2159, %v2085, %v2164
    %v2169 = vsel %vm2160, %v2154, %v2165
    %v2170 = vsel %vm2161, %v2156, %v2166
    %2171 = vst [vmem:[#allocation5] sm:$0xff] %v2167
    %2172 = vst [vmem:[#allocation5 + $0x8] sm:$0xff] %v2168
    %2173 = vst [vmem:[#allocation5 + $0x10] sm:$0xff] %v2169
    %2174 = vst [vmem:[#allocation5 + $0x18] sm:$0xff] %v2170
    // Predicated region
    $region26: #{tpu_custom_call.1} parent=1 // pred_check
      _
    $region27: #{tpu_custom_call.1} parent=1 // pred_check_branch
      %2176 = sbr.rel (0) target = $region29
    $region28: #{tpu_custom_call.1} parent=1 // pred_region
      %s2178 = ssub.s32 512, 512
      %2179 = vsyncadd [#allocation3], %s2178
      %s2181 = sshll.u32 [#allocation5], 4
      %s2182 = int_to_ptr.vmem [resolvable:$true] %s2181
      %2184 = dma.vmem_to_hbm [thread:$0]  %s2182, 512, %s5, [#allocation3]
    $region29: #{tpu_custom_call.1} parent=1 // pred_fallthru
      _
    // Predicated region
    $region30: #{tpu_custom_call.1} parent=1 // pred_check
      _
    $region31: #{tpu_custom_call.1} parent=1 // pred_check_branch
      %2186 = sbr.rel (0) target = $region33
    $region32: #{tpu_custom_call.1} parent=1 // pred_region
      %2187 = dma.done [#allocation3], 512
    $region33: #{tpu_custom_call.1} parent=1 // pred_fallthru
      _
    %2188 = vsyncpa [#allocation3], 1
    %2189 = vsyncpa [#allocation4], 1

</llo_original>
